<compile_context>
chip_gen: v7x
topology: tpu7x:2x2x1
jax: 0.10.0
libtpu: 0.0.40
codegen_flags: <defaults>
</compile_context>

<pallas_src>
import functools

import jax
import jax.numpy as jnp
from jax import lax
from jax.experimental import pallas as pl
from jax.experimental.pallas import tpu as pltpu

_F32 = jnp.float32

# Conservative, generation-safe VMEM budgeting (fits v7x's 64 MiB physical
# VMEM; v5e/v6e have 128 MiB). Scoped default is only 16/32 MiB, so set it.
_VMEM_LIMIT_BYTES = 48 * 1024 * 1024
_FASTPATH_BYTES = 20 * 1024 * 1024     # whole-problem-in-VMEM single-shot budget
_TILE_TARGET_BYTES = 6 * 1024 * 1024   # per-block budget for the tiled fallback
_MAX_ROW_TILE = 2048


def _round_up(x, m):
    return (x + m - 1) // m * m


def _pick_row_tile(n_rows, bytes_per_row):
    rt = (_TILE_TARGET_BYTES // max(bytes_per_row, 1)) // 8 * 8
    return int(max(8, min(rt, _MAX_ROW_TILE, _round_up(n_rows, 8))))


def _compiler_params(semantics):
    return pltpu.CompilerParams(
        dimension_semantics=semantics,
        vmem_limit_bytes=_VMEM_LIMIT_BYTES,
    )


# ---------------------------------------------------------------------------
# Fastest path: the WHOLE multi-layer MLP resident in VMEM, one invocation.
# ---------------------------------------------------------------------------
def _make_fused_mlp_kernel(num_layers, eps, inv_n, acts, has_l2norm):
    def kernel(*refs):
        x_ref = refs[0]
        o_ref = refs[-1]
        p_refs = refs[1:-1]          # 3 refs per layer: W, gamma, beta
        h = x_ref[...].astype(_F32)
        for li in range(num_layers):
            w = p_refs[3 * li][...].astype(_F32)
            g = p_refs[3 * li + 1][...].astype(_F32)
            b = p_refs[3 * li + 2][...].astype(_F32)
            h = jnp.dot(h, w, preferred_element_type=_F32,
                        precision=lax.Precision.HIGHEST)
            mean = jnp.sum(h, axis=0, keepdims=True) * inv_n
            d = h - mean                                         # centered -> stable var
            var = jnp.sum(d * d, axis=0, keepdims=True) * inv_n  # biased (PyTorch norm)
            y = d * (g * lax.rsqrt(var + eps)) + b
            if acts[li]:
                y = jnp.maximum(y, 0.0)
            if has_l2norm:
                nrm = jnp.sqrt(jnp.sum(y * y, axis=1, keepdims=True))
                y = y / jnp.maximum(nrm, 1e-12)
            h = y
        o_ref[...] = h.astype(o_ref.dtype)
    return kernel


def _fused_mlp_bytes(n, dims):
    total = 4 * n * dims[0]
    for d_in, d_out in zip(dims[:-1], dims[1:]):
        total += 4 * (d_in * d_out + 2 * d_out)   # params
        total += 4 * 3 * n * d_out                # h, centered, y working set
    return total


def _fused_multi_layer_call(x, params, dims, acts, eps, has_l2norm):
    n = x.shape[0]
    num_layers = len(params)
    kern = _make_fused_mlp_kernel(num_layers, float(eps), 1.0 / n,
                                  tuple(bool(a) for a in acts), bool(has_l2norm))
    flat_inputs = [x]
    in_specs = [pl.BlockSpec((n, dims[0]), lambda i: (0, 0))]
    for li, (w, gamma, beta) in enumerate(params):
        d_in, d_out = dims[li], dims[li + 1]
        flat_inputs += [w,
                        gamma.reshape(1, d_out).astype(_F32),
                        beta.reshape(1, d_out).astype(_F32)]
        in_specs += [
            pl.BlockSpec((d_in, d_out), lambda i: (0, 0)),
            pl.BlockSpec((1, d_out), lambda i: (0, 0)),
            pl.BlockSpec((1, d_out), lambda i: (0, 0)),
        ]
    return pl.pallas_call(
        kern,
        out_shape=jax.ShapeDtypeStruct((n, dims[-1]), x.dtype),
        grid_spec=pltpu.PrefetchScalarGridSpec(
            num_scalar_prefetch=0,
            grid=(1,),
            in_specs=in_specs,
            out_specs=pl.BlockSpec((n, dims[-1]), lambda i: (0, 0)),
        ),
        compiler_params=_compiler_params(("arbitrary",)),
    )(*flat_inputs)


# ---------------------------------------------------------------------------
# Per-layer fast path: one layer resident in VMEM (single invocation).
# ---------------------------------------------------------------------------
def _fused_layer_kernel(x_ref, w_ref, gamma_ref, beta_ref, o_ref, *,
                        eps, inv_n, has_act, has_l2norm):
    x = x_ref[...].astype(_F32)
    w = w_ref[...].astype(_F32)
    h = jnp.dot(x, w, preferred_element_type=_F32,
                precision=lax.Precision.HIGHEST)
    mean = jnp.sum(h, axis=0, keepdims=True) * inv_n
    d = h - mean
    var = jnp.sum(d * d, axis=0, keepdims=True) * inv_n
    scale = gamma_ref[...].astype(_F32) * lax.rsqrt(var + eps)
    y = d * scale + beta_ref[...].astype(_F32)
    if has_act:
        y = jnp.maximum(y, 0.0)
    if has_l2norm:
        nrm = jnp.sqrt(jnp.sum(y * y, axis=1, keepdims=True))
        y = y / jnp.maximum(nrm, 1e-12)
    o_ref[...] = y.astype(o_ref.dtype)


# ---------------------------------------------------------------------------
# Tiled fallback, pass 1: per-channel sum / sum-of-squares of h = x @ W.
# No h writeback to HBM; accumulators are resident (same block index every
# step, reduction axis "arbitrary"); tail rows of the cdiv grid are masked.
# ---------------------------------------------------------------------------
def _stats_kernel(x_ref, w_ref, sum_ref, sq_ref, *, n_rows, row_tile):
    i = pl.program_id(0)

    @pl.when(i == 0)
    def _():
        sum_ref[...] = jnp.zeros_like(sum_ref)
        sq_ref[...] = jnp.zeros_like(sq_ref)

    h = jnp.dot(x_ref[...].astype(_F32), w_ref[...].astype(_F32),
                preferred_element_type=_F32, precision=lax.Precision.HIGHEST)
    row_ids = i * row_tile + lax.broadcasted_iota(jnp.int32, h.shape, 0)
    hm = jnp.where(row_ids < n_rows, h, 0.0)
    sum_ref[...] += jnp.sum(hm, axis=0, keepdims=True)
    sq_ref[...] += jnp.sum(hm * hm, axis=0, keepdims=True)


# ---------------------------------------------------------------------------
# Tiled fallback, pass 2: y = act((x @ W) * scale + shift). scale/shift are
# precomputed once in the wrapper (hoisted rsqrt + affine fold). The matmul is
# recomputed here, which is cheaper than round-tripping the f32 h through HBM
# for GNN-sized channel counts (mem-bound regime).
# ---------------------------------------------------------------------------
def _matmul_norm_act_kernel(x_ref, w_ref, scale_ref, shift_ref, o_ref, *,
                            has_act, has_l2norm):
    h = jnp.dot(x_ref[...].astype(_F32), w_ref[...].astype(_F32),
                preferred_element_type=_F32, precision=lax.Precision.HIGHEST)
    y = h * scale_ref[...] + shift_ref[...]
    if has_act:
        y = jnp.maximum(y, 0.0)
    if has_l2norm:
        nrm = jnp.sqrt(jnp.sum(y * y, axis=1, keepdims=True))
        y = y / jnp.maximum(nrm, 1e-12)
    o_ref[...] = y.astype(o_ref.dtype)


def linear_bn_act(x, w, gamma, beta, *, eps=1e-5, has_act=True,
                  has_l2norm=False, force_tiled=False, row_tile=None):
    """One GeneralLayer on node features: y = act(BatchNorm1d(x @ w))."""
    n, c_in = x.shape
    kc, c_out = w.shape
    assert kc == c_in
    gamma2d = gamma.reshape(1, c_out).astype(_F32)
    beta2d = beta.reshape(1, c_out).astype(_F32)

    # ---- fast path: whole layer fits in VMEM --------------------------------
    fast_bytes = 4 * (n * c_in + c_in * c_out + 3 * n * c_out + 2 * c_out)
    if not force_tiled and fast_bytes <= _FASTPATH_BYTES:
        kern = functools.partial(
            _fused_layer_kernel, eps=float(eps), inv_n=1.0 / n,
            has_act=bool(has_act), has_l2norm=bool(has_l2norm))
        return pl.pallas_call(
            kern,
            out_shape=jax.ShapeDtypeStruct((n, c_out), x.dtype),
            grid_spec=pltpu.PrefetchScalarGridSpec(
                num_scalar_prefetch=0,
                grid=(1,),
                in_specs=[
                    pl.BlockSpec((n, c_in), lambda i: (0, 0)),
                    pl.BlockSpec((c_in, c_out), lambda i: (0, 0)),
                    pl.BlockSpec((1, c_out), lambda i: (0, 0)),
                    pl.BlockSpec((1, c_out), lambda i: (0, 0)),
                ],
                out_specs=pl.BlockSpec((n, c_out), lambda i: (0, 0)),
            ),
            compiler_params=_compiler_params(("arbitrary",)),
        )(x, w, gamma2d, beta2d)

    # ---- tiled fallback (large N) -------------------------------------------
    bytes_per_row = 4 * (c_in + 2 * c_out)
    rt = row_tile if row_tile is not None else _pick_row_tile(n, bytes_per_row)
    rt = max(8, _round_up(rt, 8))
    grid_rows = pl.cdiv(n, rt)

    # Pass 1: batch statistics only (no h materialization in HBM).
    kern1 = functools.partial(_stats_kernel, n_rows=n, row_tile=rt)
    sums, sqs = pl.pallas_call(
        kern1,
        out_shape=(
            jax.ShapeDtypeStruct((1, c_out), _F32),
            jax.ShapeDtypeStruct((1, c_out), _F32),
        ),
        grid_spec=pltpu.PrefetchScalarGridSpec(
            num_scalar_prefetch=0,
            grid=(grid_rows,),
            in_specs=[
                pl.BlockSpec((rt, c_in), lambda i: (i, 0)),
                pl.BlockSpec((c_in, c_out), lambda i: (0, 0)),
            ],
            out_specs=(
                pl.BlockSpec((1, c_out), lambda i: (0, 0)),
                pl.BlockSpec((1, c_out), lambda i: (0, 0)),
            ),
        ),
        compiler_params=_compiler_params(("arbitrary",)),
    )(x, w)

    # Tiny (1, C) glue, hoisted out of the per-tile body. Precision caveat:
    # E[x^2]-E[x]^2 in f32 can cancel when |mean| >> std; clamp at 0.
    inv_n = jnp.float32(1.0 / n)
    mean = sums * inv_n
    var = jnp.maximum(sqs * inv_n - mean * mean, 0.0)
    scale = gamma2d * lax.rsqrt(var + jnp.float32(eps))
    shift = beta2d - mean * scale

    # Pass 2: recompute matmul, apply folded affine + activation, write y.
    kern2 = functools.partial(_matmul_norm_act_kernel, has_act=bool(has_act),
                              has_l2norm=bool(has_l2norm))
    return pl.pallas_call(
        kern2,
        out_shape=jax.ShapeDtypeStruct((n, c_out), x.dtype),
        grid_spec=pltpu.PrefetchScalarGridSpec(
            num_scalar_prefetch=0,
            grid=(grid_rows,),
            in_specs=[
                pl.BlockSpec((rt, c_in), lambda i: (i, 0)),
                pl.BlockSpec((c_in, c_out), lambda i: (0, 0)),
                pl.BlockSpec((1, c_out), lambda i: (0, 0)),
                pl.BlockSpec((1, c_out), lambda i: (0, 0)),
            ],
            out_specs=pl.BlockSpec((rt, c_out), lambda i: (i, 0)),
        ),
        compiler_params=_compiler_params(("parallel",)),
    )(x, w, scale, shift)


def general_multi_layer(x, params, *, eps=1e-5, final_act=True,
                        has_l2norm=False, force_tiled=False, row_tile=None,
                        fuse_layers=True):
    """GeneralMultiLayer.forward on node features x (N, dim_in).

    params: list of (W, gamma, beta) per layer, W of shape (d_in, d_out).
    """
    num_layers = len(params)
    n = x.shape[0]
    dims = [x.shape[1]] + [w.shape[1] for (w, _, _) in params]
    acts = [final_act if i == num_layers - 1 else True for i in range(num_layers)]

    # Whole-MLP single-kernel path: everything resident in VMEM.
    if (fuse_layers and not force_tiled
            and _fused_mlp_bytes(n, dims) <= _FASTPATH_BYTES):
        return _fused_multi_layer_call(x, params, dims, acts, eps, has_l2norm)

    for i, (w, gamma, beta) in enumerate(params):
        x = linear_bn_act(x, w, gamma, beta, eps=eps, has_act=acts[i],
                          has_l2norm=has_l2norm, force_tiled=force_tiled,
                          row_tile=row_tile)
    return x


# ---------------------------------------------------------------------------
# Pure-JAX reference
# ---------------------------------------------------------------------------
def _ref_layer(x, w, gamma, beta, eps, has_act, has_l2norm):
    h = jnp.dot(x.astype(_F32), w.astype(_F32), precision=lax.Precision.HIGHEST)
    mean = jnp.mean(h, axis=0, keepdims=True)
    var = jnp.mean((h - mean) ** 2, axis=0, keepdims=True)   # biased
    y = (h - mean) * lax.rsqrt(var + eps) * gamma.reshape(1, -1) + beta.reshape(1, -1)
    if has_act:
        y = jnp.maximum(y, 0.0)
    if has_l2norm:
        nrm = jnp.sqrt(jnp.sum(y * y, axis=1, keepdims=True))
        y = y / jnp.maximum(nrm, 1e-12)
    return y.astype(x.dtype)


def _ref_multi_layer(x, params, eps=1e-5, final_act=True, has_l2norm=False):
    num_layers = len(params)
    for i, (w, gamma, beta) in enumerate(params):
        has_act = final_act if i == num_layers - 1 else True
        x = _ref_layer(x, w, gamma, beta, eps, has_act, has_l2norm)
    return x


if __name__ == "__main__":
    # GeneralMultiLayer('linear', num_layers=2, dim_in=16, dim_out=32, dim_inner=32)
    num_layers = 2
    dim_in, dim_inner, dim_out = 16, 32, 32
    n_nodes = 64
    eps = 1e-5

    key = jax.random.PRNGKey(0)
    keys = jax.random.split(key, 2 + 3 * num_layers)
    x = jax.random.normal(keys[0], (n_nodes, dim_in), dtype=_F32)
    x_big = jax.random.normal(keys[1], (100, dim_in), dtype=_F32)  # ragged N

    dims = [dim_in] + [dim_inner] * (num_layers - 1) + [dim_out]
    params = []
    for i in range(num_layers):
        kw, kg, kb = keys[2 + 3 * i], keys[3 + 3 * i], keys[4 + 3 * i]
        d_in, d_out = dims[i], dims[i + 1]
        w = jax.random.normal(kw, (d_in, d_out), dtype=_F32) / jnp.sqrt(d_in)
        gamma = 1.0 + 0.1 * jax.random.normal(kg, (d_out,), dtype=_F32)
        beta = 0.1 * jax.random.normal(kb, (d_out,), dtype=_F32)
        params.append((w, gamma, beta))

    y_ref = _ref_multi_layer(x, params, eps=eps)

    # 1) small N -> fully-fused whole-MLP kernel (one pallas_call).
    y = jax.block_until_ready(general_multi_layer(x, params, eps=eps))
    assert y.shape == (n_nodes, dim_out)
    assert jnp.allclose(y, y_ref, atol=2e-3, rtol=2e-3), float(
        jnp.max(jnp.abs(y - y_ref)))

    # 2) per-layer fast path (layer fusion disabled).
    y1 = jax.block_until_ready(
        general_multi_layer(x, params, eps=eps, fuse_layers=False))
    assert jnp.allclose(y1, y_ref, atol=2e-3, rtol=2e-3), float(
        jnp.max(jnp.abs(y1 - y_ref)))

    # 3) tiled fallback: stats pass + matmul/normalize pass with a cdiv grid
    #    (N=100 not divisible by row_tile=32), no f32 intermediate in HBM.
    y2 = jax.block_until_ready(
        general_multi_layer(x_big, params, eps=eps, force_tiled=True, row_tile=32))
    y2_ref = _ref_multi_layer(x_big, params, eps=eps)
    assert y2.shape == (x_big.shape[0], dim_out)
    assert jnp.allclose(y2, y2_ref, atol=2e-3, rtol=2e-3), float(
        jnp.max(jnp.abs(y2 - y2_ref)))

    print("KERNEL_OK")
</pallas_src>

<mosaic_0001>
module attributes {stable_mosaic.version = 11 : i64} {
  func.func @kernel(%arg0: i32, %arg1: memref<64x16xf32, #tpu.memory_space<vmem>>, %arg2: memref<16x32xf32, #tpu.memory_space<vmem>>, %arg3: memref<1x32xf32, #tpu.memory_space<vmem>>, %arg4: memref<1x32xf32, #tpu.memory_space<vmem>>, %arg5: memref<32x32xf32, #tpu.memory_space<vmem>>, %arg6: memref<1x32xf32, #tpu.memory_space<vmem>>, %arg7: memref<1x32xf32, #tpu.memory_space<vmem>>, %arg8: memref<64x32xf32, #tpu.memory_space<vmem>>) attributes {dimension_semantics = [#tpu.dimension_semantics<arbitrary>], iteration_bounds = array<i64: 1>, scalar_prefetch = 0 : i64, scratch_operands = 0 : i64, tpu.core_type = #tpu.core_type<tc>, window_params = [{pipeline_mode = #tpu.pipeline_mode<synchronous>, transform_indices = @transform_0, window_bounds = array<i64: 64, 16>}, {pipeline_mode = #tpu.pipeline_mode<synchronous>, transform_indices = @transform_1, window_bounds = array<i64: 16, 32>}, {pipeline_mode = #tpu.pipeline_mode<synchronous>, transform_indices = @transform_2, window_bounds = array<i64: 1, 32>}, {pipeline_mode = #tpu.pipeline_mode<synchronous>, transform_indices = @transform_3, window_bounds = array<i64: 1, 32>}, {pipeline_mode = #tpu.pipeline_mode<synchronous>, transform_indices = @transform_4, window_bounds = array<i64: 32, 32>}, {pipeline_mode = #tpu.pipeline_mode<synchronous>, transform_indices = @transform_5, window_bounds = array<i64: 1, 32>}, {pipeline_mode = #tpu.pipeline_mode<synchronous>, transform_indices = @transform_6, window_bounds = array<i64: 1, 32>}, {pipeline_mode = #tpu.pipeline_mode<synchronous>, transform_indices = @transform_7, window_bounds = array<i64: 64, 32>}]} {
    %c0 = arith.constant 0 : index
    %c0_0 = arith.constant 0 : index
    %0 = vector.load %arg1[%c0, %c0_0] : memref<64x16xf32, #tpu.memory_space<vmem>>, vector<64x16xf32>
    %c0_1 = arith.constant 0 : index
    %c0_2 = arith.constant 0 : index
    %1 = vector.load %arg2[%c0_1, %c0_2] : memref<16x32xf32, #tpu.memory_space<vmem>>, vector<16x32xf32>
    %c0_3 = arith.constant 0 : index
    %c0_4 = arith.constant 0 : index
    %2 = vector.load %arg3[%c0_3, %c0_4] : memref<1x32xf32, #tpu.memory_space<vmem>>, vector<1x32xf32>
    %c0_5 = arith.constant 0 : index
    %c0_6 = arith.constant 0 : index
    %3 = vector.load %arg4[%c0_5, %c0_6] : memref<1x32xf32, #tpu.memory_space<vmem>>, vector<1x32xf32>
    %cst = arith.constant dense<0.000000e+00> : vector<64x32xf32>
    %4 = tpu.matmul %0, %1, %cst {dimension_numbers = #tpu.dot_dimension_numbers<[1], [0], [0], [1], [0, 0, 1, 1], [], []>, precision = #tpu.contract_precision<fp32>} : vector<64x16xf32>, vector<16x32xf32>, vector<64x32xf32> -> vector<64x32xf32>
    %cst_7 = arith.constant dense<0.000000e+00> : vector<32xf32>
    %5 = vector.multi_reduction <add>, %4, %cst_7 [0] : vector<64x32xf32> to vector<32xf32>
    %6 = vector.shape_cast %5 : vector<32xf32> to vector<1x32xf32>
    %cst_8 = arith.constant 1.562500e-02 : f32
    %7 = vector.broadcast %cst_8 : f32 to vector<1x32xf32>
    %8 = arith.mulf %6, %7 : vector<1x32xf32>
    %9 = vector.broadcast %8 : vector<1x32xf32> to vector<64x32xf32>
    %10 = arith.subf %4, %9 : vector<64x32xf32>
    %11 = arith.mulf %10, %10 : vector<64x32xf32>
    %cst_9 = arith.constant dense<0.000000e+00> : vector<32xf32>
    %12 = vector.multi_reduction <add>, %11, %cst_9 [0] : vector<64x32xf32> to vector<32xf32>
    %13 = vector.shape_cast %12 : vector<32xf32> to vector<1x32xf32>
    %cst_10 = arith.constant 1.562500e-02 : f32
    %14 = vector.broadcast %cst_10 : f32 to vector<1x32xf32>
    %15 = arith.mulf %13, %14 : vector<1x32xf32>
    %cst_11 = arith.constant 9.99999974E-6 : f32
    %16 = vector.broadcast %cst_11 : f32 to vector<1x32xf32>
    %17 = arith.addf %15, %16 : vector<1x32xf32>
    %18 = math.rsqrt %17 : vector<1x32xf32>
    %19 = arith.mulf %2, %18 : vector<1x32xf32>
    %20 = vector.broadcast %19 : vector<1x32xf32> to vector<64x32xf32>
    %21 = arith.mulf %10, %20 : vector<64x32xf32>
    %22 = vector.broadcast %3 : vector<1x32xf32> to vector<64x32xf32>
    %23 = arith.addf %21, %22 : vector<64x32xf32>
    %cst_12 = arith.constant 0.000000e+00 : f32
    %24 = vector.broadcast %cst_12 : f32 to vector<64x32xf32>
    %25 = arith.maximumf %23, %24 : vector<64x32xf32>
    %c0_13 = arith.constant 0 : index
    %c0_14 = arith.constant 0 : index
    %26 = vector.load %arg5[%c0_13, %c0_14] : memref<32x32xf32, #tpu.memory_space<vmem>>, vector<32x32xf32>
    %c0_15 = arith.constant 0 : index
    %c0_16 = arith.constant 0 : index
    %27 = vector.load %arg6[%c0_15, %c0_16] : memref<1x32xf32, #tpu.memory_space<vmem>>, vector<1x32xf32>
    %c0_17 = arith.constant 0 : index
    %c0_18 = arith.constant 0 : index
    %28 = vector.load %arg7[%c0_17, %c0_18] : memref<1x32xf32, #tpu.memory_space<vmem>>, vector<1x32xf32>
    %cst_19 = arith.constant dense<0.000000e+00> : vector<64x32xf32>
    %29 = tpu.matmul %25, %26, %cst_19 {dimension_numbers = #tpu.dot_dimension_numbers<[1], [0], [0], [1], [0, 0, 1, 1], [], []>, precision = #tpu.contract_precision<fp32>} : vector<64x32xf32>, vector<32x32xf32>, vector<64x32xf32> -> vector<64x32xf32>
    %cst_20 = arith.constant dense<0.000000e+00> : vector<32xf32>
    %30 = vector.multi_reduction <add>, %29, %cst_20 [0] : vector<64x32xf32> to vector<32xf32>
    %31 = vector.shape_cast %30 : vector<32xf32> to vector<1x32xf32>
    %cst_21 = arith.constant 1.562500e-02 : f32
    %32 = vector.broadcast %cst_21 : f32 to vector<1x32xf32>
    %33 = arith.mulf %31, %32 : vector<1x32xf32>
    %34 = vector.broadcast %33 : vector<1x32xf32> to vector<64x32xf32>
    %35 = arith.subf %29, %34 : vector<64x32xf32>
    %36 = arith.mulf %35, %35 : vector<64x32xf32>
    %cst_22 = arith.constant dense<0.000000e+00> : vector<32xf32>
    %37 = vector.multi_reduction <add>, %36, %cst_22 [0] : vector<64x32xf32> to vector<32xf32>
    %38 = vector.shape_cast %37 : vector<32xf32> to vector<1x32xf32>
    %cst_23 = arith.constant 1.562500e-02 : f32
    %39 = vector.broadcast %cst_23 : f32 to vector<1x32xf32>
    %40 = arith.mulf %38, %39 : vector<1x32xf32>
    %cst_24 = arith.constant 9.99999974E-6 : f32
    %41 = vector.broadcast %cst_24 : f32 to vector<1x32xf32>
    %42 = arith.addf %40, %41 : vector<1x32xf32>
    %43 = math.rsqrt %42 : vector<1x32xf32>
    %44 = arith.mulf %27, %43 : vector<1x32xf32>
    %45 = vector.broadcast %44 : vector<1x32xf32> to vector<64x32xf32>
    %46 = arith.mulf %35, %45 : vector<64x32xf32>
    %47 = vector.broadcast %28 : vector<1x32xf32> to vector<64x32xf32>
    %48 = arith.addf %46, %47 : vector<64x32xf32>
    %cst_25 = arith.constant 0.000000e+00 : f32
    %49 = vector.broadcast %cst_25 : f32 to vector<64x32xf32>
    %50 = arith.maximumf %48, %49 : vector<64x32xf32>
    %c0_26 = arith.constant 0 : index
    %c0_27 = arith.constant 0 : index
    %51 = vector.load %arg8[%c0_26, %c0_27] : memref<64x32xf32, #tpu.memory_space<vmem>>, vector<64x32xf32>
    tpu.vector_store %arg8[%c0_26, %c0_27], %50 {strides = array<i32>} : memref<64x32xf32, #tpu.memory_space<vmem>>, vector<64x32xf32>,
    return
  }
  func.func @transform_0(%arg0: i32) -> (i32, i32) {
    %c0_i32 = arith.constant 0 : i32
    %c0_i32_0 = arith.constant 0 : i32
    %c0_i32_1 = arith.constant 0 : i32
    return %c0_i32, %c0_i32_0 : i32, i32
  }
  func.func @transform_1(%arg0: i32) -> (i32, i32) {
    %c0_i32 = arith.constant 0 : i32
    %c0_i32_0 = arith.constant 0 : i32
    %c0_i32_1 = arith.constant 0 : i32
    return %c0_i32, %c0_i32_0 : i32, i32
  }
  func.func @transform_2(%arg0: i32) -> (i32, i32) {
    %c0_i32 = arith.constant 0 : i32
    %c0_i32_0 = arith.constant 0 : i32
    %c0_i32_1 = arith.constant 0 : i32
    return %c0_i32, %c0_i32_0 : i32, i32
  }
  func.func @transform_3(%arg0: i32) -> (i32, i32) {
    %c0_i32 = arith.constant 0 : i32
    %c0_i32_0 = arith.constant 0 : i32
    %c0_i32_1 = arith.constant 0 : i32
    return %c0_i32, %c0_i32_0 : i32, i32
  }
  func.func @transform_4(%arg0: i32) -> (i32, i32) {
    %c0_i32 = arith.constant 0 : i32
    %c0_i32_0 = arith.constant 0 : i32
    %c0_i32_1 = arith.constant 0 : i32
    return %c0_i32, %c0_i32_0 : i32, i32
  }
  func.func @transform_5(%arg0: i32) -> (i32, i32) {
    %c0_i32 = arith.constant 0 : i32
    %c0_i32_0 = arith.constant 0 : i32
    %c0_i32_1 = arith.constant 0 : i32
    return %c0_i32, %c0_i32_0 : i32, i32
  }
  func.func @transform_6(%arg0: i32) -> (i32, i32) {
    %c0_i32 = arith.constant 0 : i32
    %c0_i32_0 = arith.constant 0 : i32
    %c0_i32_1 = arith.constant 0 : i32
    return %c0_i32, %c0_i32_0 : i32, i32
  }
  func.func @transform_7(%arg0: i32) -> (i32, i32) {
    %c0_i32 = arith.constant 0 : i32
    %c0_i32_0 = arith.constant 0 : i32
    %c0_i32_1 = arith.constant 0 : i32
    return %c0_i32, %c0_i32_0 : i32, i32
  }
}

</mosaic_0001>

<llo_original>
// kernel: tpu_custom_call.1
$region0: #{tpu_custom_call.1}
  #allocation0 [shape = 'u32[]', space=smem, size = 0x4, offset = 0x4, fixed_abs, tag = 'smem constant byte address 0x4 - core index']
  #allocation1 [shape = 'u32[144,128]{1,0:T(1,128)}', space=vmem, size = 0x12000, scoped, tag = 'internal scratch']
  %s0 = inlined_call_operand.vmem [shape: f32[64,16], index: 0, kind: input, shape index: {}]
  %s1 = inlined_call_operand.vmem [shape: f32[16,32], index: 1, kind: input, shape index: {}]
  %s2 = inlined_call_operand.vmem [shape: f32[1,32], index: 2, kind: input, shape index: {}]
  %s3 = inlined_call_operand.vmem [shape: f32[1,32], index: 3, kind: input, shape index: {}]
  %s4 = inlined_call_operand.vmem [shape: f32[32,32], index: 4, kind: input, shape index: {}]
  %s5 = inlined_call_operand.vmem [shape: f32[1,32], index: 5, kind: input, shape index: {}]
  %s6 = inlined_call_operand.vmem [shape: f32[1,32], index: 6, kind: input, shape index: {}]
  %s7 = inlined_call_operand.vmem [shape: f32[64,32], index: 7, kind: output, shape index: {}]
  %s8 = sld [smem:[#allocation0]]
  $region38: #{tpu_custom_call.1} parent=0
    _
  %s10 = ssub.s32 1, %s8
  %s11 = scalar_select 0, %s10, %s8
  // Predicated region
  $region2: #{tpu_custom_call.1} parent=0 // pred_check
    _
  $region3: #{tpu_custom_call.1} parent=0 // pred_check_branch
    %13 = sbr.rel (0) target = $region5
  $region4: #{tpu_custom_call.1} parent=0 // pred_region
    _
  $region5: #{tpu_custom_call.1} parent=0 // pred_fallthru
    _
  // Predicated region
  $region6: #{tpu_custom_call.1} parent=0 // pred_check
    _
  $region7: #{tpu_custom_call.1} parent=0 // pred_check_branch
    %15 = sbr.rel (0) target = $region9
  $region8: #{tpu_custom_call.1} parent=0 // pred_region
    _
  $region9: #{tpu_custom_call.1} parent=0 // pred_fallthru
    _
  // Predicated region
  $region10: #{tpu_custom_call.1} parent=0 // pred_check
    _
  $region11: #{tpu_custom_call.1} parent=0 // pred_check_branch
    %17 = sbr.rel (0) target = $region13
  $region12: #{tpu_custom_call.1} parent=0 // pred_region
    _
  $region13: #{tpu_custom_call.1} parent=0 // pred_fallthru
    _
  // Predicated region
  $region14: #{tpu_custom_call.1} parent=0 // pred_check
    _
  $region15: #{tpu_custom_call.1} parent=0 // pred_check_branch
    %19 = sbr.rel (0) target = $region17
  $region16: #{tpu_custom_call.1} parent=0 // pred_region
    _
  $region17: #{tpu_custom_call.1} parent=0 // pred_fallthru
    _
  // Predicated region
  $region18: #{tpu_custom_call.1} parent=0 // pred_check
    _
  $region19: #{tpu_custom_call.1} parent=0 // pred_check_branch
    %21 = sbr.rel (0) target = $region21
  $region20: #{tpu_custom_call.1} parent=0 // pred_region
    _
  $region21: #{tpu_custom_call.1} parent=0 // pred_fallthru
    _
  // Predicated region
  $region22: #{tpu_custom_call.1} parent=0 // pred_check
    _
  $region23: #{tpu_custom_call.1} parent=0 // pred_check_branch
    %23 = sbr.rel (0) target = $region25
  $region24: #{tpu_custom_call.1} parent=0 // pred_region
    _
  $region25: #{tpu_custom_call.1} parent=0 // pred_fallthru
    _
  // Predicated region
  $region26: #{tpu_custom_call.1} parent=0 // pred_check
    _
  $region27: #{tpu_custom_call.1} parent=0 // pred_check_branch
    %25 = sbr.rel (0) target = $region29
  $region28: #{tpu_custom_call.1} parent=0 // pred_region
    _
  $region29: #{tpu_custom_call.1} parent=0 // pred_fallthru
    _
  %v26 = vld [vmem:[%s0] sm:$0xff]
  %v27 = vld [vmem:[%s0 + $0x8] sm:$0xff]
  %v28 = vld [vmem:[%s0 + $0x10] sm:$0xff]
  %v29 = vld [vmem:[%s0 + $0x18] sm:$0xff]
  %v30 = vld [vmem:[%s0 + $0x20] sm:$0xff]
  %v31 = vld [vmem:[%s0 + $0x28] sm:$0xff]
  %v32 = vld [vmem:[%s0 + $0x30] sm:$0xff]
  %v33 = vld [vmem:[%s0 + $0x38] sm:$0xff]
  %v34 = vld [vmem:[%s1] sm:$0xff]
  %v35 = vld [vmem:[%s1 + $0x8] sm:$0xff]
  %v36 = vld [vmem:[%s2] sm:$0x1]
  %v37 = vld [vmem:[%s3] sm:$0x1]
  %vm38 = vcmask 130048
  %v40 = vsel %vm38, %v26, 0
  %v43 = vsel %vm38, %v27, 0
  %v46 = vsel %vm38, %v28, 0
  %v49 = vsel %vm38, %v29, 0
  %v52 = vsel %vm38, %v30, 0
  %v55 = vsel %vm38, %v31, 0
  %v58 = vsel %vm38, %v32, 0
  %v61 = vsel %vm38, %v33, 0
  %63 = vmatprep.subr.mxu0 0.0
  %v64 = vand.u32 %v34, 4294901760
  %65 = vmatpush1.msra.mxu0 %v64
  %66 = vmatprep.subr.mxu0 0.0
  %v67 = vand.u32 %v35, 4294901760
  %68 = vmatpush1.msra.mxu0 %v67
  %69 = vmatprep.subr.mxu0 0.0
  %70 = vmatpush1.msra.mxu0 0.0
  %71 = vmatprep.subr.mxu0 0.0
  %72 = vmatpush1.msra.mxu0 0.0
  %73 = vmatprep.subr.mxu0 0.0
  %74 = vmatpush1.msra.mxu0 0.0
  %75 = vmatprep.subr.mxu0 0.0
  %76 = vmatpush1.msra.mxu0 0.0
  %77 = vmatprep.subr.mxu0 0.0
  %78 = vmatpush1.msra.mxu0 0.0
  %79 = vmatprep.subr.mxu0 0.0
  %80 = vmatpush1.msra.mxu0 0.0
  %81 = vmatprep.subr.mxu0 0.0
  %82 = vmatpush1.msra.mxu0 0.0
  %83 = vmatprep.subr.mxu0 0.0
  %84 = vmatpush1.msra.mxu0 0.0
  %85 = vmatprep.subr.mxu0 0.0
  %86 = vmatpush1.msra.mxu0 0.0
  %87 = vmatprep.subr.mxu0 0.0
  %88 = vmatpush1.msra.mxu0 0.0
  %89 = vmatprep.subr.mxu0 0.0
  %90 = vmatpush1.msra.mxu0 0.0
  %91 = vmatprep.subr.mxu0 0.0
  %92 = vmatpush1.msra.mxu0 0.0
  %93 = vmatprep.subr.mxu0 0.0
  %94 = vmatpush1.msra.mxu0 0.0
  %95 = vmatprep.subr.mxu0 0.0
  %96 = vmatpush1.msra.mxu0 0.0
  %97 = vmatprep.subr.mxu0 0.0
  %98 = vmatpush1.msra.mxu0 0.0
  %99 = vmatprep.subr.mxu0 0.0
  %100 = vmatpush1.msra.mxu0 0.0
  %101 = vmatprep.subr.mxu0 0.0
  %102 = vmatpush1.msra.mxu0 0.0
  %103 = vmatprep.subr.mxu0 0.0
  %104 = vmatpush1.msra.mxu0 0.0
  %105 = vmatprep.subr.mxu0 0.0
  %106 = vmatpush1.msra.mxu0 0.0
  %107 = vmatprep.subr.mxu0 0.0
  %108 = vmatpush1.msra.mxu0 0.0
  %109 = vmatprep.subr.mxu0 0.0
  %110 = vmatpush1.msra.mxu0 0.0
  %111 = vmatprep.subr.mxu0 0.0
  %112 = vmatpush1.msra.mxu0 0.0
  %113 = vmatprep.subr.mxu0 0.0
  %114 = vmatpush1.msra.mxu0 0.0
  %115 = vmatprep.subr.mxu0 0.0
  %116 = vmatpush1.msra.mxu0 0.0
  %117 = vmatprep.subr.mxu0 0.0
  %118 = vmatpush1.msra.mxu0 0.0
  %119 = vmatprep.subr.mxu0 0.0
  %120 = vmatpush1.msra.mxu0 0.0
  %121 = vmatprep.subr.mxu0 0.0
  %122 = vmatpush1.msra.mxu0 0.0
  %123 = vmatprep.subr.mxu0 0.0
  %124 = vmatpush1.msra.mxu0 0.0
  %125 = vmatprep.subr.mxu0 0.0
  %126 = vmatpush1.msra.mxu0 0.0
  %127 = vmatprep.subr.mxu0 0.0
  %128 = vmatpush1.msra.mxu0 0.0
  %129 = vmatprep.mubr.f32.mxu0 0.0
  %v130 = vand.u32 %v40, 4294901760
  %v131 = vsub.f32 %v40, %v130
  %v132 = vand.u32 %v131, 4294901760
  %v133 = vsub.f32 %v131, %v132
  %v134 = vand.u32 %v133, 4294901760
  %135 = vmatmul.mubr.f32.gmra.mrb[0].mxu0 %v134
  %v136 = vpop.f32.mrb[0].mxu0
  %v137 = vadd.f32 0.0, %v136
  %v138 = vpop.f32.mrb[0].mxu0
  %139 = vmatprep.mubr.f32.mxu0 0.0
  %v140 = vand.u32 %v43, 4294901760
  %v141 = vsub.f32 %v43, %v140
  %v142 = vand.u32 %v141, 4294901760
  %v143 = vsub.f32 %v141, %v142
  %v144 = vand.u32 %v143, 4294901760
  %145 = vmatmul.mubr.f32.gmra.mrb[0].mxu0 %v144
  %v146 = vpop.f32.mrb[0].mxu0
  %v147 = vadd.f32 0.0, %v146
  %v148 = vpop.f32.mrb[0].mxu0
  %149 = vmatprep.mubr.f32.mxu0 0.0
  %v150 = vand.u32 %v46, 4294901760
  %v151 = vsub.f32 %v46, %v150
  %v152 = vand.u32 %v151, 4294901760
  %v153 = vsub.f32 %v151, %v152
  %v154 = vand.u32 %v153, 4294901760
  %155 = vmatmul.mubr.f32.gmra.mrb[0].mxu0 %v154
  %v156 = vpop.f32.mrb[0].mxu0
  %v157 = vadd.f32 0.0, %v156
  %v158 = vpop.f32.mrb[0].mxu0
  %159 = vmatprep.mubr.f32.mxu0 0.0
  %v160 = vand.u32 %v49, 4294901760
  %v161 = vsub.f32 %v49, %v160
  %v162 = vand.u32 %v161, 4294901760
  %v163 = vsub.f32 %v161, %v162
  %v164 = vand.u32 %v163, 4294901760
  %165 = vmatmul.mubr.f32.gmra.mrb[0].mxu0 %v164
  %v166 = vpop.f32.mrb[0].mxu0
  %v167 = vadd.f32 0.0, %v166
  %v168 = vpop.f32.mrb[0].mxu0
  %169 = vmatprep.mubr.f32.mxu0 0.0
  %v170 = vand.u32 %v52, 4294901760
  %v171 = vsub.f32 %v52, %v170
  %v172 = vand.u32 %v171, 4294901760
  %v173 = vsub.f32 %v171, %v172
  %v174 = vand.u32 %v173, 4294901760
  %175 = vmatmul.mubr.f32.gmra.mrb[0].mxu0 %v174
  %v176 = vpop.f32.mrb[0].mxu0
  %v177 = vadd.f32 0.0, %v176
  %v178 = vpop.f32.mrb[0].mxu0
  %179 = vmatprep.mubr.f32.mxu0 0.0
  %v180 = vand.u32 %v55, 4294901760
  %v181 = vsub.f32 %v55, %v180
  %v182 = vand.u32 %v181, 4294901760
  %v183 = vsub.f32 %v181, %v182
  %v184 = vand.u32 %v183, 4294901760
  %185 = vmatmul.mubr.f32.gmra.mrb[0].mxu0 %v184
  %v186 = vpop.f32.mrb[0].mxu0
  %v187 = vadd.f32 0.0, %v186
  %v188 = vpop.f32.mrb[0].mxu0
  %189 = vmatprep.mubr.f32.mxu0 0.0
  %v190 = vand.u32 %v58, 4294901760
  %v191 = vsub.f32 %v58, %v190
  %v192 = vand.u32 %v191, 4294901760
  %v193 = vsub.f32 %v191, %v192
  %v194 = vand.u32 %v193, 4294901760
  %195 = vmatmul.mubr.f32.gmra.mrb[0].mxu0 %v194
  %v196 = vpop.f32.mrb[0].mxu0
  %v197 = vadd.f32 0.0, %v196
  %v198 = vpop.f32.mrb[0].mxu0
  %199 = vmatprep.mubr.f32.mxu0 0.0
  %v200 = vand.u32 %v61, 4294901760
  %v201 = vsub.f32 %v61, %v200
  %v202 = vand.u32 %v201, 4294901760
  %v203 = vsub.f32 %v201, %v202
  %v204 = vand.u32 %v203, 4294901760
  %205 = vmatmul.mubr.f32.gmra.mrb[0].mxu0 %v204
  %v206 = vpop.f32.mrb[0].mxu0
  %v207 = vadd.f32 0.0, %v206
  %v208 = vpop.f32.mrb[0].mxu0
  %209 = vdwg.mxu0
  %210 = vmatprep.subr.mxu0 0.0
  %v211 = vand.u32 %v34, 4294901760
  %v212 = vsub.f32 %v34, %v211
  %v213 = vand.u32 %v212, 4294901760
  %v214 = vsub.f32 %v212, %v213
  %v215 = vand.u32 %v214, 4294901760
  %216 = vmatpush1.msra.mxu0 %v215
  %217 = vmatprep.subr.mxu0 0.0
  %v218 = vand.u32 %v35, 4294901760
  %v219 = vsub.f32 %v35, %v218
  %v220 = vand.u32 %v219, 4294901760
  %v221 = vsub.f32 %v219, %v220
  %v222 = vand.u32 %v221, 4294901760
  %223 = vmatpush1.msra.mxu0 %v222
  %224 = vmatprep.subr.mxu0 0.0
  %225 = vmatpush1.msra.mxu0 0.0
  %226 = vmatprep.subr.mxu0 0.0
  %227 = vmatpush1.msra.mxu0 0.0
  %228 = vmatprep.subr.mxu0 0.0
  %229 = vmatpush1.msra.mxu0 0.0
  %230 = vmatprep.subr.mxu0 0.0
  %231 = vmatpush1.msra.mxu0 0.0
  %232 = vmatprep.subr.mxu0 0.0
  %233 = vmatpush1.msra.mxu0 0.0
  %234 = vmatprep.subr.mxu0 0.0
  %235 = vmatpush1.msra.mxu0 0.0
  %236 = vmatprep.subr.mxu0 0.0
  %237 = vmatpush1.msra.mxu0 0.0
  %238 = vmatprep.subr.mxu0 0.0
  %239 = vmatpush1.msra.mxu0 0.0
  %240 = vmatprep.subr.mxu0 0.0
  %241 = vmatpush1.msra.mxu0 0.0
  %242 = vmatprep.subr.mxu0 0.0
  %243 = vmatpush1.msra.mxu0 0.0
  %244 = vmatprep.subr.mxu0 0.0
  %245 = vmatpush1.msra.mxu0 0.0
  %246 = vmatprep.subr.mxu0 0.0
  %247 = vmatpush1.msra.mxu0 0.0
  %248 = vmatprep.subr.mxu0 0.0
  %249 = vmatpush1.msra.mxu0 0.0
  %250 = vmatprep.subr.mxu0 0.0
  %251 = vmatpush1.msra.mxu0 0.0
  %252 = vmatprep.subr.mxu0 0.0
  %253 = vmatpush1.msra.mxu0 0.0
  %254 = vmatprep.subr.mxu0 0.0
  %255 = vmatpush1.msra.mxu0 0.0
  %256 = vmatprep.subr.mxu0 0.0
  %257 = vmatpush1.msra.mxu0 0.0
  %258 = vmatprep.subr.mxu0 0.0
  %259 = vmatpush1.msra.mxu0 0.0
  %260 = vmatprep.subr.mxu0 0.0
  %261 = vmatpush1.msra.mxu0 0.0
  %262 = vmatprep.subr.mxu0 0.0
  %263 = vmatpush1.msra.mxu0 0.0
  %264 = vmatprep.subr.mxu0 0.0
  %265 = vmatpush1.msra.mxu0 0.0
  %266 = vmatprep.subr.mxu0 0.0
  %267 = vmatpush1.msra.mxu0 0.0
  %268 = vmatprep.subr.mxu0 0.0
  %269 = vmatpush1.msra.mxu0 0.0
  %270 = vmatprep.subr.mxu0 0.0
  %271 = vmatpush1.msra.mxu0 0.0
  %272 = vmatprep.subr.mxu0 0.0
  %273 = vmatpush1.msra.mxu0 0.0
  %274 = vmatprep.subr.mxu0 0.0
  %275 = vmatpush1.msra.mxu0 0.0
  %276 = vmatprep.subr.mxu0 0.0
  %277 = vmatpush1.msra.mxu0 0.0
  %278 = vmatprep.subr.mxu0 0.0
  %279 = vmatpush1.msra.mxu0 0.0
  %280 = vmatprep.subr.mxu0 0.0
  %281 = vmatpush1.msra.mxu0 0.0
  %282 = vmatprep.subr.mxu0 0.0
  %283 = vmatpush1.msra.mxu0 0.0
  %284 = vmatprep.mubr.f32.mxu0 0.0
  %v285 = vand.u32 %v40, 4294901760
  %286 = vmatmul.mubr.f32.gmra.mrb[0].mxu0 %v285
  %v287 = vpop.f32.mrb[0].mxu0
  %v288 = vadd.f32 %v137, %v287
  %v289 = vpop.f32.mrb[0].mxu0
  %290 = vmatprep.mubr.f32.mxu0 0.0
  %v291 = vand.u32 %v43, 4294901760
  %292 = vmatmul.mubr.f32.gmra.mrb[0].mxu0 %v291
  %v293 = vpop.f32.mrb[0].mxu0
  %v294 = vadd.f32 %v147, %v293
  %v295 = vpop.f32.mrb[0].mxu0
  %296 = vmatprep.mubr.f32.mxu0 0.0
  %v297 = vand.u32 %v46, 4294901760
  %298 = vmatmul.mubr.f32.gmra.mrb[0].mxu0 %v297
  %v299 = vpop.f32.mrb[0].mxu0
  %v300 = vadd.f32 %v157, %v299
  %v301 = vpop.f32.mrb[0].mxu0
  %302 = vmatprep.mubr.f32.mxu0 0.0
  %v303 = vand.u32 %v49, 4294901760
  %304 = vmatmul.mubr.f32.gmra.mrb[0].mxu0 %v303
  %v305 = vpop.f32.mrb[0].mxu0
  %v306 = vadd.f32 %v167, %v305
  %v307 = vpop.f32.mrb[0].mxu0
  %308 = vmatprep.mubr.f32.mxu0 0.0
  %v309 = vand.u32 %v52, 4294901760
  %310 = vmatmul.mubr.f32.gmra.mrb[0].mxu0 %v309
  %v311 = vpop.f32.mrb[0].mxu0
  %v312 = vadd.f32 %v177, %v311
  %v313 = vpop.f32.mrb[0].mxu0
  %314 = vmatprep.mubr.f32.mxu0 0.0
  %v315 = vand.u32 %v55, 4294901760
  %316 = vmatmul.mubr.f32.gmra.mrb[0].mxu0 %v315
  %v317 = vpop.f32.mrb[0].mxu0
  %v318 = vadd.f32 %v187, %v317
  %v319 = vpop.f32.mrb[0].mxu0
  %320 = vmatprep.mubr.f32.mxu0 0.0
  %v321 = vand.u32 %v58, 4294901760
  %322 = vmatmul.mubr.f32.gmra.mrb[0].mxu0 %v321
  %v323 = vpop.f32.mrb[0].mxu0
  %v324 = vadd.f32 %v197, %v323
  %v325 = vpop.f32.mrb[0].mxu0
  %326 = vmatprep.mubr.f32.mxu0 0.0
  %v327 = vand.u32 %v61, 4294901760
  %328 = vmatmul.mubr.f32.gmra.mrb[0].mxu0 %v327
  %v329 = vpop.f32.mrb[0].mxu0
  %v330 = vadd.f32 %v207, %v329
  %v331 = vpop.f32.mrb[0].mxu0
  %332 = vdwg.mxu0
  %333 = vmatprep.subr.mxu0 0.0
  %v334 = vand.u32 %v34, 4294901760
  %v335 = vsub.f32 %v34, %v334
  %336 = vmatpush1.msra.mxu0 %v335
  %337 = vmatprep.subr.mxu0 0.0
  %v338 = vand.u32 %v35, 4294901760
  %v339 = vsub.f32 %v35, %v338
  %340 = vmatpush1.msra.mxu0 %v339
  %341 = vmatprep.subr.mxu0 0.0
  %342 = vmatpush1.msra.mxu0 0.0
  %343 = vmatprep.subr.mxu0 0.0
  %344 = vmatpush1.msra.mxu0 0.0
  %345 = vmatprep.subr.mxu0 0.0
  %346 = vmatpush1.msra.mxu0 0.0
  %347 = vmatprep.subr.mxu0 0.0
  %348 = vmatpush1.msra.mxu0 0.0
  %349 = vmatprep.subr.mxu0 0.0
  %350 = vmatpush1.msra.mxu0 0.0
  %351 = vmatprep.subr.mxu0 0.0
  %352 = vmatpush1.msra.mxu0 0.0
  %353 = vmatprep.subr.mxu0 0.0
  %354 = vmatpush1.msra.mxu0 0.0
  %355 = vmatprep.subr.mxu0 0.0
  %356 = vmatpush1.msra.mxu0 0.0
  %357 = vmatprep.subr.mxu0 0.0
  %358 = vmatpush1.msra.mxu0 0.0
  %359 = vmatprep.subr.mxu0 0.0
  %360 = vmatpush1.msra.mxu0 0.0
  %361 = vmatprep.subr.mxu0 0.0
  %362 = vmatpush1.msra.mxu0 0.0
  %363 = vmatprep.subr.mxu0 0.0
  %364 = vmatpush1.msra.mxu0 0.0
  %365 = vmatprep.subr.mxu0 0.0
  %366 = vmatpush1.msra.mxu0 0.0
  %367 = vmatprep.subr.mxu0 0.0
  %368 = vmatpush1.msra.mxu0 0.0
  %369 = vmatprep.subr.mxu0 0.0
  %370 = vmatpush1.msra.mxu0 0.0
  %371 = vmatprep.subr.mxu0 0.0
  %372 = vmatpush1.msra.mxu0 0.0
  %373 = vmatprep.subr.mxu0 0.0
  %374 = vmatpush1.msra.mxu0 0.0
  %375 = vmatprep.subr.mxu0 0.0
  %376 = vmatpush1.msra.mxu0 0.0
  %377 = vmatprep.subr.mxu0 0.0
  %378 = vmatpush1.msra.mxu0 0.0
  %379 = vmatprep.subr.mxu0 0.0
  %380 = vmatpush1.msra.mxu0 0.0
  %381 = vmatprep.subr.mxu0 0.0
  %382 = vmatpush1.msra.mxu0 0.0
  %383 = vmatprep.subr.mxu0 0.0
  %384 = vmatpush1.msra.mxu0 0.0
  %385 = vmatprep.subr.mxu0 0.0
  %386 = vmatpush1.msra.mxu0 0.0
  %387 = vmatprep.subr.mxu0 0.0
  %388 = vmatpush1.msra.mxu0 0.0
  %389 = vmatprep.subr.mxu0 0.0
  %390 = vmatpush1.msra.mxu0 0.0
  %391 = vmatprep.subr.mxu0 0.0
  %392 = vmatpush1.msra.mxu0 0.0
  %393 = vmatprep.subr.mxu0 0.0
  %394 = vmatpush1.msra.mxu0 0.0
  %395 = vmatprep.subr.mxu0 0.0
  %396 = vmatpush1.msra.mxu0 0.0
  %397 = vmatprep.subr.mxu0 0.0
  %398 = vmatpush1.msra.mxu0 0.0
  %399 = vmatprep.subr.mxu0 0.0
  %400 = vmatpush1.msra.mxu0 0.0
  %401 = vmatprep.mubr.f32.mxu0 0.0
  %v402 = vand.u32 %v40, 4294901760
  %v403 = vsub.f32 %v40, %v402
  %404 = vmatmul.mubr.f32.gmra.mrb[0].mxu0 %v403
  %v405 = vpop.f32.mrb[0].mxu0
  %v406 = vadd.f32 %v288, %v405
  %v407 = vpop.f32.mrb[0].mxu0
  %408 = vmatprep.mubr.f32.mxu0 0.0
  %v409 = vand.u32 %v43, 4294901760
  %v410 = vsub.f32 %v43, %v409
  %411 = vmatmul.mubr.f32.gmra.mrb[0].mxu0 %v410
  %v412 = vpop.f32.mrb[0].mxu0
  %v413 = vadd.f32 %v294, %v412
  %v414 = vpop.f32.mrb[0].mxu0
  %415 = vmatprep.mubr.f32.mxu0 0.0
  %v416 = vand.u32 %v46, 4294901760
  %v417 = vsub.f32 %v46, %v416
  %418 = vmatmul.mubr.f32.gmra.mrb[0].mxu0 %v417
  %v419 = vpop.f32.mrb[0].mxu0
  %v420 = vadd.f32 %v300, %v419
  %v421 = vpop.f32.mrb[0].mxu0
  %422 = vmatprep.mubr.f32.mxu0 0.0
  %v423 = vand.u32 %v49, 4294901760
  %v424 = vsub.f32 %v49, %v423
  %425 = vmatmul.mubr.f32.gmra.mrb[0].mxu0 %v424
  %v426 = vpop.f32.mrb[0].mxu0
  %v427 = vadd.f32 %v306, %v426
  %v428 = vpop.f32.mrb[0].mxu0
  %429 = vmatprep.mubr.f32.mxu0 0.0
  %v430 = vand.u32 %v52, 4294901760
  %v431 = vsub.f32 %v52, %v430
  %432 = vmatmul.mubr.f32.gmra.mrb[0].mxu0 %v431
  %v433 = vpop.f32.mrb[0].mxu0
  %v434 = vadd.f32 %v312, %v433
  %v435 = vpop.f32.mrb[0].mxu0
  %436 = vmatprep.mubr.f32.mxu0 0.0
  %v437 = vand.u32 %v55, 4294901760
  %v438 = vsub.f32 %v55, %v437
  %439 = vmatmul.mubr.f32.gmra.mrb[0].mxu0 %v438
  %v440 = vpop.f32.mrb[0].mxu0
  %v441 = vadd.f32 %v318, %v440
  %v442 = vpop.f32.mrb[0].mxu0
  %443 = vmatprep.mubr.f32.mxu0 0.0
  %v444 = vand.u32 %v58, 4294901760
  %v445 = vsub.f32 %v58, %v444
  %446 = vmatmul.mubr.f32.gmra.mrb[0].mxu0 %v445
  %v447 = vpop.f32.mrb[0].mxu0
  %v448 = vadd.f32 %v324, %v447
  %v449 = vpop.f32.mrb[0].mxu0
  %450 = vmatprep.mubr.f32.mxu0 0.0
  %v451 = vand.u32 %v61, 4294901760
  %v452 = vsub.f32 %v61, %v451
  %453 = vmatmul.mubr.f32.gmra.mrb[0].mxu0 %v452
  %v454 = vpop.f32.mrb[0].mxu0
  %v455 = vadd.f32 %v330, %v454
  %v456 = vpop.f32.mrb[0].mxu0
  %457 = vdwg.mxu0
  %458 = vmatprep.subr.mxu0 0.0
  %v459 = vand.u32 %v34, 4294901760
  %460 = vmatpush1.msra.mxu0 %v459
  %461 = vmatprep.subr.mxu0 0.0
  %v462 = vand.u32 %v35, 4294901760
  %463 = vmatpush1.msra.mxu0 %v462
  %464 = vmatprep.subr.mxu0 0.0
  %465 = vmatpush1.msra.mxu0 0.0
  %466 = vmatprep.subr.mxu0 0.0
  %467 = vmatpush1.msra.mxu0 0.0
  %468 = vmatprep.subr.mxu0 0.0
  %469 = vmatpush1.msra.mxu0 0.0
  %470 = vmatprep.subr.mxu0 0.0
  %471 = vmatpush1.msra.mxu0 0.0
  %472 = vmatprep.subr.mxu0 0.0
  %473 = vmatpush1.msra.mxu0 0.0
  %474 = vmatprep.subr.mxu0 0.0
  %475 = vmatpush1.msra.mxu0 0.0
  %476 = vmatprep.subr.mxu0 0.0
  %477 = vmatpush1.msra.mxu0 0.0
  %478 = vmatprep.subr.mxu0 0.0
  %479 = vmatpush1.msra.mxu0 0.0
  %480 = vmatprep.subr.mxu0 0.0
  %481 = vmatpush1.msra.mxu0 0.0
  %482 = vmatprep.subr.mxu0 0.0
  %483 = vmatpush1.msra.mxu0 0.0
  %484 = vmatprep.subr.mxu0 0.0
  %485 = vmatpush1.msra.mxu0 0.0
  %486 = vmatprep.subr.mxu0 0.0
  %487 = vmatpush1.msra.mxu0 0.0
  %488 = vmatprep.subr.mxu0 0.0
  %489 = vmatpush1.msra.mxu0 0.0
  %490 = vmatprep.subr.mxu0 0.0
  %491 = vmatpush1.msra.mxu0 0.0
  %492 = vmatprep.subr.mxu0 0.0
  %493 = vmatpush1.msra.mxu0 0.0
  %494 = vmatprep.subr.mxu0 0.0
  %495 = vmatpush1.msra.mxu0 0.0
  %496 = vmatprep.subr.mxu0 0.0
  %497 = vmatpush1.msra.mxu0 0.0
  %498 = vmatprep.subr.mxu0 0.0
  %499 = vmatpush1.msra.mxu0 0.0
  %500 = vmatprep.subr.mxu0 0.0
  %501 = vmatpush1.msra.mxu0 0.0
  %502 = vmatprep.subr.mxu0 0.0
  %503 = vmatpush1.msra.mxu0 0.0
  %504 = vmatprep.subr.mxu0 0.0
  %505 = vmatpush1.msra.mxu0 0.0
  %506 = vmatprep.subr.mxu0 0.0
  %507 = vmatpush1.msra.mxu0 0.0
  %508 = vmatprep.subr.mxu0 0.0
  %509 = vmatpush1.msra.mxu0 0.0
  %510 = vmatprep.subr.mxu0 0.0
  %511 = vmatpush1.msra.mxu0 0.0
  %512 = vmatprep.subr.mxu0 0.0
  %513 = vmatpush1.msra.mxu0 0.0
  %514 = vmatprep.subr.mxu0 0.0
  %515 = vmatpush1.msra.mxu0 0.0
  %516 = vmatprep.subr.mxu0 0.0
  %517 = vmatpush1.msra.mxu0 0.0
  %518 = vmatprep.subr.mxu0 0.0
  %519 = vmatpush1.msra.mxu0 0.0
  %520 = vmatprep.subr.mxu0 0.0
  %521 = vmatpush1.msra.mxu0 0.0
  %522 = vmatprep.subr.mxu0 0.0
  %523 = vmatpush1.msra.mxu0 0.0
  %524 = vmatprep.mubr.f32.mxu0 0.0
  %v525 = vand.u32 %v40, 4294901760
  %v526 = vsub.f32 %v40, %v525
  %v527 = vand.u32 %v526, 4294901760
  %528 = vmatmul.mubr.f32.gmra.mrb[0].mxu0 %v527
  %v529 = vpop.f32.mrb[0].mxu0
  %v530 = vadd.f32 %v406, %v529
  %v531 = vpop.f32.mrb[0].mxu0
  %532 = vmatprep.mubr.f32.mxu0 0.0
  %v533 = vand.u32 %v43, 4294901760
  %v534 = vsub.f32 %v43, %v533
  %v535 = vand.u32 %v534, 4294901760
  %536 = vmatmul.mubr.f32.gmra.mrb[0].mxu0 %v535
  %v537 = vpop.f32.mrb[0].mxu0
  %v538 = vadd.f32 %v413, %v537
  %v539 = vpop.f32.mrb[0].mxu0
  %540 = vmatprep.mubr.f32.mxu0 0.0
  %v541 = vand.u32 %v46, 4294901760
  %v542 = vsub.f32 %v46, %v541
  %v543 = vand.u32 %v542, 4294901760
  %544 = vmatmul.mubr.f32.gmra.mrb[0].mxu0 %v543
  %v545 = vpop.f32.mrb[0].mxu0
  %v546 = vadd.f32 %v420, %v545
  %v547 = vpop.f32.mrb[0].mxu0
  %548 = vmatprep.mubr.f32.mxu0 0.0
  %v549 = vand.u32 %v49, 4294901760
  %v550 = vsub.f32 %v49, %v549
  %v551 = vand.u32 %v550, 4294901760
  %552 = vmatmul.mubr.f32.gmra.mrb[0].mxu0 %v551
  %v553 = vpop.f32.mrb[0].mxu0
  %v554 = vadd.f32 %v427, %v553
  %v555 = vpop.f32.mrb[0].mxu0
  %556 = vmatprep.mubr.f32.mxu0 0.0
  %v557 = vand.u32 %v52, 4294901760
  %v558 = vsub.f32 %v52, %v557
  %v559 = vand.u32 %v558, 4294901760
  %560 = vmatmul.mubr.f32.gmra.mrb[0].mxu0 %v559
  %v561 = vpop.f32.mrb[0].mxu0
  %v562 = vadd.f32 %v434, %v561
  %v563 = vpop.f32.mrb[0].mxu0
  %564 = vmatprep.mubr.f32.mxu0 0.0
  %v565 = vand.u32 %v55, 4294901760
  %v566 = vsub.f32 %v55, %v565
  %v567 = vand.u32 %v566, 4294901760
  %568 = vmatmul.mubr.f32.gmra.mrb[0].mxu0 %v567
  %v569 = vpop.f32.mrb[0].mxu0
  %v570 = vadd.f32 %v441, %v569
  %v571 = vpop.f32.mrb[0].mxu0
  %572 = vmatprep.mubr.f32.mxu0 0.0
  %v573 = vand.u32 %v58, 4294901760
  %v574 = vsub.f32 %v58, %v573
  %v575 = vand.u32 %v574, 4294901760
  %576 = vmatmul.mubr.f32.gmra.mrb[0].mxu0 %v575
  %v577 = vpop.f32.mrb[0].mxu0
  %v578 = vadd.f32 %v448, %v577
  %v579 = vpop.f32.mrb[0].mxu0
  %580 = vmatprep.mubr.f32.mxu0 0.0
  %v581 = vand.u32 %v61, 4294901760
  %v582 = vsub.f32 %v61, %v581
  %v583 = vand.u32 %v582, 4294901760
  %584 = vmatmul.mubr.f32.gmra.mrb[0].mxu0 %v583
  %v585 = vpop.f32.mrb[0].mxu0
  %v586 = vadd.f32 %v455, %v585
  %v587 = vpop.f32.mrb[0].mxu0
  %588 = vdwg.mxu0
  %589 = vmatprep.subr.mxu0 0.0
  %v590 = vand.u32 %v34, 4294901760
  %v591 = vsub.f32 %v34, %v590
  %v592 = vand.u32 %v591, 4294901760
  %593 = vmatpush1.msra.mxu0 %v592
  %594 = vmatprep.subr.mxu0 0.0
  %v595 = vand.u32 %v35, 4294901760
  %v596 = vsub.f32 %v35, %v595
  %v597 = vand.u32 %v596, 4294901760
  %598 = vmatpush1.msra.mxu0 %v597
  %599 = vmatprep.subr.mxu0 0.0
  %600 = vmatpush1.msra.mxu0 0.0
  %601 = vmatprep.subr.mxu0 0.0
  %602 = vmatpush1.msra.mxu0 0.0
  %603 = vmatprep.subr.mxu0 0.0
  %604 = vmatpush1.msra.mxu0 0.0
  %605 = vmatprep.subr.mxu0 0.0
  %606 = vmatpush1.msra.mxu0 0.0
  %607 = vmatprep.subr.mxu0 0.0
  %608 = vmatpush1.msra.mxu0 0.0
  %609 = vmatprep.subr.mxu0 0.0
  %610 = vmatpush1.msra.mxu0 0.0
  %611 = vmatprep.subr.mxu0 0.0
  %612 = vmatpush1.msra.mxu0 0.0
  %613 = vmatprep.subr.mxu0 0.0
  %614 = vmatpush1.msra.mxu0 0.0
  %615 = vmatprep.subr.mxu0 0.0
  %616 = vmatpush1.msra.mxu0 0.0
  %617 = vmatprep.subr.mxu0 0.0
  %618 = vmatpush1.msra.mxu0 0.0
  %619 = vmatprep.subr.mxu0 0.0
  %620 = vmatpush1.msra.mxu0 0.0
  %621 = vmatprep.subr.mxu0 0.0
  %622 = vmatpush1.msra.mxu0 0.0
  %623 = vmatprep.subr.mxu0 0.0
  %624 = vmatpush1.msra.mxu0 0.0
  %625 = vmatprep.subr.mxu0 0.0
  %626 = vmatpush1.msra.mxu0 0.0
  %627 = vmatprep.subr.mxu0 0.0
  %628 = vmatpush1.msra.mxu0 0.0
  %629 = vmatprep.subr.mxu0 0.0
  %630 = vmatpush1.msra.mxu0 0.0
  %631 = vmatprep.subr.mxu0 0.0
  %632 = vmatpush1.msra.mxu0 0.0
  %633 = vmatprep.subr.mxu0 0.0
  %634 = vmatpush1.msra.mxu0 0.0
  %635 = vmatprep.subr.mxu0 0.0
  %636 = vmatpush1.msra.mxu0 0.0
  %637 = vmatprep.subr.mxu0 0.0
  %638 = vmatpush1.msra.mxu0 0.0
  %639 = vmatprep.subr.mxu0 0.0
  %640 = vmatpush1.msra.mxu0 0.0
  %641 = vmatprep.subr.mxu0 0.0
  %642 = vmatpush1.msra.mxu0 0.0
  %643 = vmatprep.subr.mxu0 0.0
  %644 = vmatpush1.msra.mxu0 0.0
  %645 = vmatprep.subr.mxu0 0.0
  %646 = vmatpush1.msra.mxu0 0.0
  %647 = vmatprep.subr.mxu0 0.0
  %648 = vmatpush1.msra.mxu0 0.0
  %649 = vmatprep.subr.mxu0 0.0
  %650 = vmatpush1.msra.mxu0 0.0
  %651 = vmatprep.subr.mxu0 0.0
  %652 = vmatpush1.msra.mxu0 0.0
  %653 = vmatprep.subr.mxu0 0.0
  %654 = vmatpush1.msra.mxu0 0.0
  %655 = vmatprep.subr.mxu0 0.0
  %656 = vmatpush1.msra.mxu0 0.0
  %657 = vmatprep.subr.mxu0 0.0
  %658 = vmatpush1.msra.mxu0 0.0
  %659 = vmatprep.mubr.f32.mxu0 0.0
  %v660 = vand.u32 %v40, 4294901760
  %661 = vmatmul.mubr.f32.gmra.mrb[0].mxu0 %v660
  %v662 = vpop.f32.mrb[0].mxu0
  %v663 = vadd.f32 %v530, %v662
  %v664 = vpop.f32.mrb[0].mxu0
  %665 = vmatprep.mubr.f32.mxu0 0.0
  %v666 = vand.u32 %v43, 4294901760
  %667 = vmatmul.mubr.f32.gmra.mrb[0].mxu0 %v666
  %v668 = vpop.f32.mrb[0].mxu0
  %v669 = vadd.f32 %v538, %v668
  %v670 = vpop.f32.mrb[0].mxu0
  %671 = vmatprep.mubr.f32.mxu0 0.0
  %v672 = vand.u32 %v46, 4294901760
  %673 = vmatmul.mubr.f32.gmra.mrb[0].mxu0 %v672
  %v674 = vpop.f32.mrb[0].mxu0
  %v675 = vadd.f32 %v546, %v674
  %v676 = vpop.f32.mrb[0].mxu0
  %677 = vmatprep.mubr.f32.mxu0 0.0
  %v678 = vand.u32 %v49, 4294901760
  %679 = vmatmul.mubr.f32.gmra.mrb[0].mxu0 %v678
  %v680 = vpop.f32.mrb[0].mxu0
  %v681 = vadd.f32 %v554, %v680
  %v682 = vpop.f32.mrb[0].mxu0
  %683 = vmatprep.mubr.f32.mxu0 0.0
  %v684 = vand.u32 %v52, 4294901760
  %685 = vmatmul.mubr.f32.gmra.mrb[0].mxu0 %v684
  %v686 = vpop.f32.mrb[0].mxu0
  %v687 = vadd.f32 %v562, %v686
  %v688 = vpop.f32.mrb[0].mxu0
  %689 = vmatprep.mubr.f32.mxu0 0.0
  %v690 = vand.u32 %v55, 4294901760
  %691 = vmatmul.mubr.f32.gmra.mrb[0].mxu0 %v690
  %v692 = vpop.f32.mrb[0].mxu0
  %v693 = vadd.f32 %v570, %v692
  %v694 = vpop.f32.mrb[0].mxu0
  %695 = vmatprep.mubr.f32.mxu0 0.0
  %v696 = vand.u32 %v58, 4294901760
  %697 = vmatmul.mubr.f32.gmra.mrb[0].mxu0 %v696
  %v698 = vpop.f32.mrb[0].mxu0
  %v699 = vadd.f32 %v578, %v698
  %v700 = vpop.f32.mrb[0].mxu0
  %701 = vmatprep.mubr.f32.mxu0 0.0
  %v702 = vand.u32 %v61, 4294901760
  %703 = vmatmul.mubr.f32.gmra.mrb[0].mxu0 %v702
  %v704 = vpop.f32.mrb[0].mxu0
  %v705 = vadd.f32 %v586, %v704
  %v706 = vpop.f32.mrb[0].mxu0
  %707 = vdwg.mxu0
  %708 = vmatprep.subr.mxu0 0.0
  %v709 = vand.u32 %v34, 4294901760
  %710 = vmatpush1.msra.mxu0 %v709
  %711 = vmatprep.subr.mxu0 0.0
  %v712 = vand.u32 %v35, 4294901760
  %713 = vmatpush1.msra.mxu0 %v712
  %714 = vmatprep.subr.mxu0 0.0
  %715 = vmatpush1.msra.mxu0 0.0
  %716 = vmatprep.subr.mxu0 0.0
  %717 = vmatpush1.msra.mxu0 0.0
  %718 = vmatprep.subr.mxu0 0.0
  %719 = vmatpush1.msra.mxu0 0.0
  %720 = vmatprep.subr.mxu0 0.0
  %721 = vmatpush1.msra.mxu0 0.0
  %722 = vmatprep.subr.mxu0 0.0
  %723 = vmatpush1.msra.mxu0 0.0
  %724 = vmatprep.subr.mxu0 0.0
  %725 = vmatpush1.msra.mxu0 0.0
  %726 = vmatprep.subr.mxu0 0.0
  %727 = vmatpush1.msra.mxu0 0.0
  %728 = vmatprep.subr.mxu0 0.0
  %729 = vmatpush1.msra.mxu0 0.0
  %730 = vmatprep.subr.mxu0 0.0
  %731 = vmatpush1.msra.mxu0 0.0
  %732 = vmatprep.subr.mxu0 0.0
  %733 = vmatpush1.msra.mxu0 0.0
  %734 = vmatprep.subr.mxu0 0.0
  %735 = vmatpush1.msra.mxu0 0.0
  %736 = vmatprep.subr.mxu0 0.0
  %737 = vmatpush1.msra.mxu0 0.0
  %738 = vmatprep.subr.mxu0 0.0
  %739 = vmatpush1.msra.mxu0 0.0
  %740 = vmatprep.subr.mxu0 0.0
  %741 = vmatpush1.msra.mxu0 0.0
  %742 = vmatprep.subr.mxu0 0.0
  %743 = vmatpush1.msra.mxu0 0.0
  %744 = vmatprep.subr.mxu0 0.0
  %745 = vmatpush1.msra.mxu0 0.0
  %746 = vmatprep.subr.mxu0 0.0
  %747 = vmatpush1.msra.mxu0 0.0
  %748 = vmatprep.subr.mxu0 0.0
  %749 = vmatpush1.msra.mxu0 0.0
  %750 = vmatprep.subr.mxu0 0.0
  %751 = vmatpush1.msra.mxu0 0.0
  %752 = vmatprep.subr.mxu0 0.0
  %753 = vmatpush1.msra.mxu0 0.0
  %754 = vmatprep.subr.mxu0 0.0
  %755 = vmatpush1.msra.mxu0 0.0
  %756 = vmatprep.subr.mxu0 0.0
  %757 = vmatpush1.msra.mxu0 0.0
  %758 = vmatprep.subr.mxu0 0.0
  %759 = vmatpush1.msra.mxu0 0.0
  %760 = vmatprep.subr.mxu0 0.0
  %761 = vmatpush1.msra.mxu0 0.0
  %762 = vmatprep.subr.mxu0 0.0
  %763 = vmatpush1.msra.mxu0 0.0
  %764 = vmatprep.subr.mxu0 0.0
  %765 = vmatpush1.msra.mxu0 0.0
  %766 = vmatprep.subr.mxu0 0.0
  %767 = vmatpush1.msra.mxu0 0.0
  %768 = vmatprep.subr.mxu0 0.0
  %769 = vmatpush1.msra.mxu0 0.0
  %770 = vmatprep.subr.mxu0 0.0
  %771 = vmatpush1.msra.mxu0 0.0
  %772 = vmatprep.subr.mxu0 0.0
  %773 = vmatpush1.msra.mxu0 0.0
  %774 = vmatprep.mubr.f32.mxu0 0.0
  %v775 = vand.u32 %v40, 4294901760
  %776 = vmatmul.mubr.f32.gmra.mrb[0].mxu0 %v775
  %v777 = vpop.f32.mrb[0].mxu0
  %v778 = vadd.f32 %v663, %v777
  %v779 = vpop.f32.mrb[0].mxu0
  %780 = vmatprep.mubr.f32.mxu0 0.0
  %v781 = vand.u32 %v43, 4294901760
  %782 = vmatmul.mubr.f32.gmra.mrb[0].mxu0 %v781
  %v783 = vpop.f32.mrb[0].mxu0
  %v784 = vadd.f32 %v669, %v783
  %v785 = vpop.f32.mrb[0].mxu0
  %786 = vmatprep.mubr.f32.mxu0 0.0
  %v787 = vand.u32 %v46, 4294901760
  %788 = vmatmul.mubr.f32.gmra.mrb[0].mxu0 %v787
  %v789 = vpop.f32.mrb[0].mxu0
  %v790 = vadd.f32 %v675, %v789
  %v791 = vpop.f32.mrb[0].mxu0
  %792 = vmatprep.mubr.f32.mxu0 0.0
  %v793 = vand.u32 %v49, 4294901760
  %794 = vmatmul.mubr.f32.gmra.mrb[0].mxu0 %v793
  %v795 = vpop.f32.mrb[0].mxu0
  %v796 = vadd.f32 %v681, %v795
  %v797 = vpop.f32.mrb[0].mxu0
  %798 = vmatprep.mubr.f32.mxu0 0.0
  %v799 = vand.u32 %v52, 4294901760
  %800 = vmatmul.mubr.f32.gmra.mrb[0].mxu0 %v799
  %v801 = vpop.f32.mrb[0].mxu0
  %v802 = vadd.f32 %v687, %v801
  %v803 = vpop.f32.mrb[0].mxu0
  %804 = vmatprep.mubr.f32.mxu0 0.0
  %v805 = vand.u32 %v55, 4294901760
  %806 = vmatmul.mubr.f32.gmra.mrb[0].mxu0 %v805
  %v807 = vpop.f32.mrb[0].mxu0
  %v808 = vadd.f32 %v693, %v807
  %v809 = vpop.f32.mrb[0].mxu0
  %810 = vmatprep.mubr.f32.mxu0 0.0
  %v811 = vand.u32 %v58, 4294901760
  %812 = vmatmul.mubr.f32.gmra.mrb[0].mxu0 %v811
  %v813 = vpop.f32.mrb[0].mxu0
  %v814 = vadd.f32 %v699, %v813
  %v815 = vpop.f32.mrb[0].mxu0
  %816 = vmatprep.mubr.f32.mxu0 0.0
  %v817 = vand.u32 %v61, 4294901760
  %818 = vmatmul.mubr.f32.gmra.mrb[0].mxu0 %v817
  %v819 = vpop.f32.mrb[0].mxu0
  %v820 = vadd.f32 %v705, %v819
  %v821 = vpop.f32.mrb[0].mxu0
  %822 = vdwg.mxu0
  %vm823 = vcmask 261120
  %v824 = vsel %vm823, %v778, 0.0
  %v825 = vsel %vm823, %v784, 0.0
  %v826 = vadd.f32 %v824, %v825
  %v827 = vsel %vm823, %v790, 0.0
  %v828 = vadd.f32 %v826, %v827
  %v829 = vsel %vm823, %v796, 0.0
  %v830 = vadd.f32 %v828, %v829
  %v831 = vsel %vm823, %v802, 0.0
  %v832 = vadd.f32 %v830, %v831
  %v833 = vsel %vm823, %v808, 0.0
  %v834 = vadd.f32 %v832, %v833
  %v835 = vsel %vm823, %v814, 0.0
  %v836 = vadd.f32 %v834, %v835
  %v837 = vsel %vm823, %v820, 0.0
  %v838 = vadd.f32 %v836, %v837
  %v839 = vrot.slane %v838, 4
  %v840 = vadd.f32 %v838, %v839
  %v841 = vrot.slane %v840, 2
  %v842 = vadd.f32 %v840, %v841
  %v843 = vrot.slane %v842, 1
  %v844 = vadd.f32 %v842, %v843
  %v845 = vmul.f32 %v844, 0.015625
  %v846 = vsub.f32 %v778, %v845
  %v847 = vsub.f32 %v784, %v845
  %v848 = vsub.f32 %v790, %v845
  %v849 = vsub.f32 %v796, %v845
  %v850 = vsub.f32 %v802, %v845
  %v851 = vsub.f32 %v808, %v845
  %v852 = vsub.f32 %v814, %v845
  %v853 = vsub.f32 %v820, %v845
  %v854 = vmul.f32 %v846, %v846
  %v855 = vmul.f32 %v847, %v847
  %v856 = vmul.f32 %v848, %v848
  %v857 = vmul.f32 %v849, %v849
  %v858 = vmul.f32 %v850, %v850
  %v859 = vmul.f32 %v851, %v851
  %v860 = vmul.f32 %v852, %v852
  %v861 = vmul.f32 %v853, %v853
  %v862 = vsel %vm823, %v854, 0.0
  %v863 = vsel %vm823, %v855, 0.0
  %v864 = vadd.f32 %v862, %v863
  %v865 = vsel %vm823, %v856, 0.0
  %v866 = vadd.f32 %v864, %v865
  %v867 = vsel %vm823, %v857, 0.0
  %v868 = vadd.f32 %v866, %v867
  %v869 = vsel %vm823, %v858, 0.0
  %v870 = vadd.f32 %v868, %v869
  %v871 = vsel %vm823, %v859, 0.0
  %v872 = vadd.f32 %v870, %v871
  %v873 = vsel %vm823, %v860, 0.0
  %v874 = vadd.f32 %v872, %v873
  %v875 = vsel %vm823, %v861, 0.0
  %v876 = vadd.f32 %v874, %v875
  %v877 = vrot.slane %v876, 4
  %v878 = vadd.f32 %v876, %v877
  %v879 = vrot.slane %v878, 2
  %v880 = vadd.f32 %v878, %v879
  %v881 = vrot.slane %v880, 1
  %v882 = vadd.f32 %v880, %v881
  %v883 = vmul.f32 %v882, 0.015625
  %v884 = vadd.f32 %v883, 1e-05
  %v885 = vrsqrt.pop %v884
  %v886 = vmul.f32 %v36, %v885
  %v888 = vlaneseq
  %v889 = vshrl.u32 %v888, 7
  %v890 = vsub.s32 0, %v889
  %v891 = vrot.slane %v886, %v890
  %v893 = vmul.f32 %v846, %v891
  %v894 = vmul.f32 %v847, %v891
  %v895 = vmul.f32 %v848, %v891
  %v896 = vmul.f32 %v849, %v891
  %v897 = vmul.f32 %v850, %v891
  %v898 = vmul.f32 %v851, %v891
  %v899 = vmul.f32 %v852, %v891
  %v900 = vmul.f32 %v853, %v891
  %v902 = vlaneseq
  %v903 = vshrl.u32 %v902, 7
  %v904 = vsub.s32 0, %v903
  %v905 = vrot.slane %v37, %v904
  %v907 = vadd.f32 %v893, %v905
  %v908 = vadd.f32 %v894, %v905
  %v909 = vadd.f32 %v895, %v905
  %v910 = vadd.f32 %v896, %v905
  %v911 = vadd.f32 %v897, %v905
  %v912 = vadd.f32 %v898, %v905
  %v913 = vadd.f32 %v899, %v905
  %v914 = vadd.f32 %v900, %v905
  %v915 = vmax.f32 %v907, 0.0
  %v916 = vmax.f32 %v908, 0.0
  %v917 = vmax.f32 %v909, 0.0
  %v918 = vmax.f32 %v910, 0.0
  %v919 = vmax.f32 %v911, 0.0
  %v920 = vmax.f32 %v912, 0.0
  %v921 = vmax.f32 %v913, 0.0
  %v922 = vmax.f32 %v914, 0.0
  %v923 = vld [vmem:[%s4] sm:$0xff]
  %v924 = vld [vmem:[%s4 + $0x8] sm:$0xff]
  %v925 = vld [vmem:[%s4 + $0x10] sm:$0xff]
  %v926 = vld [vmem:[%s4 + $0x18] sm:$0xff]
  %v927 = vld [vmem:[%s5] sm:$0x1]
  %v928 = vld [vmem:[%s6] sm:$0x1]
  %v930 = vsel %vm823, %v915, 0
  %v933 = vsel %vm823, %v916, 0
  %v936 = vsel %vm823, %v917, 0
  %v939 = vsel %vm823, %v918, 0
  %v942 = vsel %vm823, %v919, 0
  %v945 = vsel %vm823, %v920, 0
  %v948 = vsel %vm823, %v921, 0
  %v951 = vsel %vm823, %v922, 0
  %953 = vmatprep.subr.mxu0 0.0
  %v954 = vand.u32 %v923, 4294901760
  %955 = vmatpush1.msra.mxu0 %v954
  %956 = vmatprep.subr.mxu0 0.0
  %v957 = vand.u32 %v924, 4294901760
  %958 = vmatpush1.msra.mxu0 %v957
  %959 = vmatprep.subr.mxu0 0.0
  %v960 = vand.u32 %v925, 4294901760
  %961 = vmatpush1.msra.mxu0 %v960
  %962 = vmatprep.subr.mxu0 0.0
  %v963 = vand.u32 %v926, 4294901760
  %964 = vmatpush1.msra.mxu0 %v963
  %965 = vmatprep.subr.mxu0 0.0
  %966 = vmatpush1.msra.mxu0 0.0
  %967 = vmatprep.subr.mxu0 0.0
  %968 = vmatpush1.msra.mxu0 0.0
  %969 = vmatprep.subr.mxu0 0.0
  %970 = vmatpush1.msra.mxu0 0.0
  %971 = vmatprep.subr.mxu0 0.0
  %972 = vmatpush1.msra.mxu0 0.0
  %973 = vmatprep.subr.mxu0 0.0
  %974 = vmatpush1.msra.mxu0 0.0
  %975 = vmatprep.subr.mxu0 0.0
  %976 = vmatpush1.msra.mxu0 0.0
  %977 = vmatprep.subr.mxu0 0.0
  %978 = vmatpush1.msra.mxu0 0.0
  %979 = vmatprep.subr.mxu0 0.0
  %980 = vmatpush1.msra.mxu0 0.0
  %981 = vmatprep.subr.mxu0 0.0
  %982 = vmatpush1.msra.mxu0 0.0
  %983 = vmatprep.subr.mxu0 0.0
  %984 = vmatpush1.msra.mxu0 0.0
  %985 = vmatprep.subr.mxu0 0.0
  %986 = vmatpush1.msra.mxu0 0.0
  %987 = vmatprep.subr.mxu0 0.0
  %988 = vmatpush1.msra.mxu0 0.0
  %989 = vmatprep.subr.mxu0 0.0
  %990 = vmatpush1.msra.mxu0 0.0
  %991 = vmatprep.subr.mxu0 0.0
  %992 = vmatpush1.msra.mxu0 0.0
  %993 = vmatprep.subr.mxu0 0.0
  %994 = vmatpush1.msra.mxu0 0.0
  %995 = vmatprep.subr.mxu0 0.0
  %996 = vmatpush1.msra.mxu0 0.0
  %997 = vmatprep.subr.mxu0 0.0
  %998 = vmatpush1.msra.mxu0 0.0
  %999 = vmatprep.subr.mxu0 0.0
  %1000 = vmatpush1.msra.mxu0 0.0
  %1001 = vmatprep.subr.mxu0 0.0
  %1002 = vmatpush1.msra.mxu0 0.0
  %1003 = vmatprep.subr.mxu0 0.0
  %1004 = vmatpush1.msra.mxu0 0.0
  %1005 = vmatprep.subr.mxu0 0.0
  %1006 = vmatpush1.msra.mxu0 0.0
  %1007 = vmatprep.subr.mxu0 0.0
  %1008 = vmatpush1.msra.mxu0 0.0
  %1009 = vmatprep.subr.mxu0 0.0
  %1010 = vmatpush1.msra.mxu0 0.0
  %1011 = vmatprep.subr.mxu0 0.0
  %1012 = vmatpush1.msra.mxu0 0.0
  %1013 = vmatprep.subr.mxu0 0.0
  %1014 = vmatpush1.msra.mxu0 0.0
  %1015 = vmatprep.subr.mxu0 0.0
  %1016 = vmatpush1.msra.mxu0 0.0
  %1017 = vmatprep.subr.mxu0 0.0
  %1018 = vmatpush1.msra.mxu0 0.0
  %1019 = vmatprep.subr.mxu0 0.0
  %1020 = vmatpush1.msra.mxu0 0.0
  %1021 = vmatprep.mubr.f32.mxu0 0.0
  %v1022 = vand.u32 %v930, 4294901760
  %v1023 = vsub.f32 %v930, %v1022
  %v1024 = vand.u32 %v1023, 4294901760
  %v1025 = vsub.f32 %v1023, %v1024
  %v1026 = vand.u32 %v1025, 4294901760
  %1027 = vmatmul.mubr.f32.gmra.mrb[0].mxu0 %v1026
  %v1028 = vpop.f32.mrb[0].mxu0
  %v1029 = vadd.f32 0.0, %v1028
  %v1030 = vpop.f32.mrb[0].mxu0
  %1031 = vmatprep.mubr.f32.mxu0 0.0
  %v1032 = vand.u32 %v933, 4294901760
  %v1033 = vsub.f32 %v933, %v1032
  %v1034 = vand.u32 %v1033, 4294901760
  %v1035 = vsub.f32 %v1033, %v1034
  %v1036 = vand.u32 %v1035, 4294901760
  %1037 = vmatmul.mubr.f32.gmra.mrb[0].mxu0 %v1036
  %v1038 = vpop.f32.mrb[0].mxu0
  %v1039 = vadd.f32 0.0, %v1038
  %v1040 = vpop.f32.mrb[0].mxu0
  %1041 = vmatprep.mubr.f32.mxu0 0.0
  %v1042 = vand.u32 %v936, 4294901760
  %v1043 = vsub.f32 %v936, %v1042
  %v1044 = vand.u32 %v1043, 4294901760
  %v1045 = vsub.f32 %v1043, %v1044
  %v1046 = vand.u32 %v1045, 4294901760
  %1047 = vmatmul.mubr.f32.gmra.mrb[0].mxu0 %v1046
  %v1048 = vpop.f32.mrb[0].mxu0
  %v1049 = vadd.f32 0.0, %v1048
  %v1050 = vpop.f32.mrb[0].mxu0
  %1051 = vmatprep.mubr.f32.mxu0 0.0
  %v1052 = vand.u32 %v939, 4294901760
  %v1053 = vsub.f32 %v939, %v1052
  %v1054 = vand.u32 %v1053, 4294901760
  %v1055 = vsub.f32 %v1053, %v1054
  %v1056 = vand.u32 %v1055, 4294901760
  %1057 = vmatmul.mubr.f32.gmra.mrb[0].mxu0 %v1056
  %v1058 = vpop.f32.mrb[0].mxu0
  %v1059 = vadd.f32 0.0, %v1058
  %v1060 = vpop.f32.mrb[0].mxu0
  %1061 = vmatprep.mubr.f32.mxu0 0.0
  %v1062 = vand.u32 %v942, 4294901760
  %v1063 = vsub.f32 %v942, %v1062
  %v1064 = vand.u32 %v1063, 4294901760
  %v1065 = vsub.f32 %v1063, %v1064
  %v1066 = vand.u32 %v1065, 4294901760
  %1067 = vmatmul.mubr.f32.gmra.mrb[0].mxu0 %v1066
  %v1068 = vpop.f32.mrb[0].mxu0
  %v1069 = vadd.f32 0.0, %v1068
  %v1070 = vpop.f32.mrb[0].mxu0
  %1071 = vmatprep.mubr.f32.mxu0 0.0
  %v1072 = vand.u32 %v945, 4294901760
  %v1073 = vsub.f32 %v945, %v1072
  %v1074 = vand.u32 %v1073, 4294901760
  %v1075 = vsub.f32 %v1073, %v1074
  %v1076 = vand.u32 %v1075, 4294901760
  %1077 = vmatmul.mubr.f32.gmra.mrb[0].mxu0 %v1076
  %v1078 = vpop.f32.mrb[0].mxu0
  %v1079 = vadd.f32 0.0, %v1078
  %v1080 = vpop.f32.mrb[0].mxu0
  %1081 = vmatprep.mubr.f32.mxu0 0.0
  %v1082 = vand.u32 %v948, 4294901760
  %v1083 = vsub.f32 %v948, %v1082
  %v1084 = vand.u32 %v1083, 4294901760
  %v1085 = vsub.f32 %v1083, %v1084
  %v1086 = vand.u32 %v1085, 4294901760
  %1087 = vmatmul.mubr.f32.gmra.mrb[0].mxu0 %v1086
  %v1088 = vpop.f32.mrb[0].mxu0
  %v1089 = vadd.f32 0.0, %v1088
  %v1090 = vpop.f32.mrb[0].mxu0
  %1091 = vmatprep.mubr.f32.mxu0 0.0
  %v1092 = vand.u32 %v951, 4294901760
  %v1093 = vsub.f32 %v951, %v1092
  %v1094 = vand.u32 %v1093, 4294901760
  %v1095 = vsub.f32 %v1093, %v1094
  %v1096 = vand.u32 %v1095, 4294901760
  %1097 = vmatmul.mubr.f32.gmra.mrb[0].mxu0 %v1096
  %v1098 = vpop.f32.mrb[0].mxu0
  %v1099 = vadd.f32 0.0, %v1098
  %v1100 = vpop.f32.mrb[0].mxu0
  %1101 = vdwg.mxu0
  %1102 = vmatprep.subr.mxu0 0.0
  %v1103 = vand.u32 %v923, 4294901760
  %v1104 = vsub.f32 %v923, %v1103
  %v1105 = vand.u32 %v1104, 4294901760
  %v1106 = vsub.f32 %v1104, %v1105
  %v1107 = vand.u32 %v1106, 4294901760
  %1108 = vmatpush1.msra.mxu0 %v1107
  %1109 = vmatprep.subr.mxu0 0.0
  %v1110 = vand.u32 %v924, 4294901760
  %v1111 = vsub.f32 %v924, %v1110
  %v1112 = vand.u32 %v1111, 4294901760
  %v1113 = vsub.f32 %v1111, %v1112
  %v1114 = vand.u32 %v1113, 4294901760
  %1115 = vmatpush1.msra.mxu0 %v1114
  %1116 = vmatprep.subr.mxu0 0.0
  %v1117 = vand.u32 %v925, 4294901760
  %v1118 = vsub.f32 %v925, %v1117
  %v1119 = vand.u32 %v1118, 4294901760
  %v1120 = vsub.f32 %v1118, %v1119
  %v1121 = vand.u32 %v1120, 4294901760
  %1122 = vmatpush1.msra.mxu0 %v1121
  %1123 = vmatprep.subr.mxu0 0.0
  %v1124 = vand.u32 %v926, 4294901760
  %v1125 = vsub.f32 %v926, %v1124
  %v1126 = vand.u32 %v1125, 4294901760
  %v1127 = vsub.f32 %v1125, %v1126
  %v1128 = vand.u32 %v1127, 4294901760
  %1129 = vmatpush1.msra.mxu0 %v1128
  %1130 = vmatprep.subr.mxu0 0.0
  %1131 = vmatpush1.msra.mxu0 0.0
  %1132 = vmatprep.subr.mxu0 0.0
  %1133 = vmatpush1.msra.mxu0 0.0
  %1134 = vmatprep.subr.mxu0 0.0
  %1135 = vmatpush1.msra.mxu0 0.0
  %1136 = vmatprep.subr.mxu0 0.0
  %1137 = vmatpush1.msra.mxu0 0.0
  %1138 = vmatprep.subr.mxu0 0.0
  %1139 = vmatpush1.msra.mxu0 0.0
  %1140 = vmatprep.subr.mxu0 0.0
  %1141 = vmatpush1.msra.mxu0 0.0
  %1142 = vmatprep.subr.mxu0 0.0
  %1143 = vmatpush1.msra.mxu0 0.0
  %1144 = vmatprep.subr.mxu0 0.0
  %1145 = vmatpush1.msra.mxu0 0.0
  %1146 = vmatprep.subr.mxu0 0.0
  %1147 = vmatpush1.msra.mxu0 0.0
  %1148 = vmatprep.subr.mxu0 0.0
  %1149 = vmatpush1.msra.mxu0 0.0
  %1150 = vmatprep.subr.mxu0 0.0
  %1151 = vmatpush1.msra.mxu0 0.0
  %1152 = vmatprep.subr.mxu0 0.0
  %1153 = vmatpush1.msra.mxu0 0.0
  %1154 = vmatprep.subr.mxu0 0.0
  %1155 = vmatpush1.msra.mxu0 0.0
  %1156 = vmatprep.subr.mxu0 0.0
  %1157 = vmatpush1.msra.mxu0 0.0
  %1158 = vmatprep.subr.mxu0 0.0
  %1159 = vmatpush1.msra.mxu0 0.0
  %1160 = vmatprep.subr.mxu0 0.0
  %1161 = vmatpush1.msra.mxu0 0.0
  %1162 = vmatprep.subr.mxu0 0.0
  %1163 = vmatpush1.msra.mxu0 0.0
  %1164 = vmatprep.subr.mxu0 0.0
  %1165 = vmatpush1.msra.mxu0 0.0
  %1166 = vmatprep.subr.mxu0 0.0
  %1167 = vmatpush1.msra.mxu0 0.0
  %1168 = vmatprep.subr.mxu0 0.0
  %1169 = vmatpush1.msra.mxu0 0.0
  %1170 = vmatprep.subr.mxu0 0.0
  %1171 = vmatpush1.msra.mxu0 0.0
  %1172 = vmatprep.subr.mxu0 0.0
  %1173 = vmatpush1.msra.mxu0 0.0
  %1174 = vmatprep.subr.mxu0 0.0
  %1175 = vmatpush1.msra.mxu0 0.0
  %1176 = vmatprep.subr.mxu0 0.0
  %1177 = vmatpush1.msra.mxu0 0.0
  %1178 = vmatprep.subr.mxu0 0.0
  %1179 = vmatpush1.msra.mxu0 0.0
  %1180 = vmatprep.subr.mxu0 0.0
  %1181 = vmatpush1.msra.mxu0 0.0
  %1182 = vmatprep.subr.mxu0 0.0
  %1183 = vmatpush1.msra.mxu0 0.0
  %1184 = vmatprep.subr.mxu0 0.0
  %1185 = vmatpush1.msra.mxu0 0.0
  %1186 = vmatprep.mubr.f32.mxu0 0.0
  %v1187 = vand.u32 %v930, 4294901760
  %1188 = vmatmul.mubr.f32.gmra.mrb[0].mxu0 %v1187
  %v1189 = vpop.f32.mrb[0].mxu0
  %v1190 = vadd.f32 %v1029, %v1189
  %v1191 = vpop.f32.mrb[0].mxu0
  %1192 = vmatprep.mubr.f32.mxu0 0.0
  %v1193 = vand.u32 %v933, 4294901760
  %1194 = vmatmul.mubr.f32.gmra.mrb[0].mxu0 %v1193
  %v1195 = vpop.f32.mrb[0].mxu0
  %v1196 = vadd.f32 %v1039, %v1195
  %v1197 = vpop.f32.mrb[0].mxu0
  %1198 = vmatprep.mubr.f32.mxu0 0.0
  %v1199 = vand.u32 %v936, 4294901760
  %1200 = vmatmul.mubr.f32.gmra.mrb[0].mxu0 %v1199
  %v1201 = vpop.f32.mrb[0].mxu0
  %v1202 = vadd.f32 %v1049, %v1201
  %v1203 = vpop.f32.mrb[0].mxu0
  %1204 = vmatprep.mubr.f32.mxu0 0.0
  %v1205 = vand.u32 %v939, 4294901760
  %1206 = vmatmul.mubr.f32.gmra.mrb[0].mxu0 %v1205
  %v1207 = vpop.f32.mrb[0].mxu0
  %v1208 = vadd.f32 %v1059, %v1207
  %v1209 = vpop.f32.mrb[0].mxu0
  %1210 = vmatprep.mubr.f32.mxu0 0.0
  %v1211 = vand.u32 %v942, 4294901760
  %1212 = vmatmul.mubr.f32.gmra.mrb[0].mxu0 %v1211
  %v1213 = vpop.f32.mrb[0].mxu0
  %v1214 = vadd.f32 %v1069, %v1213
  %v1215 = vpop.f32.mrb[0].mxu0
  %1216 = vmatprep.mubr.f32.mxu0 0.0
  %v1217 = vand.u32 %v945, 4294901760
  %1218 = vmatmul.mubr.f32.gmra.mrb[0].mxu0 %v1217
  %v1219 = vpop.f32.mrb[0].mxu0
  %v1220 = vadd.f32 %v1079, %v1219
  %v1221 = vpop.f32.mrb[0].mxu0
  %1222 = vmatprep.mubr.f32.mxu0 0.0
  %v1223 = vand.u32 %v948, 4294901760
  %1224 = vmatmul.mubr.f32.gmra.mrb[0].mxu0 %v1223
  %v1225 = vpop.f32.mrb[0].mxu0
  %v1226 = vadd.f32 %v1089, %v1225
  %v1227 = vpop.f32.mrb[0].mxu0
  %1228 = vmatprep.mubr.f32.mxu0 0.0
  %v1229 = vand.u32 %v951, 4294901760
  %1230 = vmatmul.mubr.f32.gmra.mrb[0].mxu0 %v1229
  %v1231 = vpop.f32.mrb[0].mxu0
  %v1232 = vadd.f32 %v1099, %v1231
  %v1233 = vpop.f32.mrb[0].mxu0
  %1234 = vdwg.mxu0
  %1235 = vmatprep.subr.mxu0 0.0
  %v1236 = vand.u32 %v923, 4294901760
  %v1237 = vsub.f32 %v923, %v1236
  %1238 = vmatpush1.msra.mxu0 %v1237
  %1239 = vmatprep.subr.mxu0 0.0
  %v1240 = vand.u32 %v924, 4294901760
  %v1241 = vsub.f32 %v924, %v1240
  %1242 = vmatpush1.msra.mxu0 %v1241
  %1243 = vmatprep.subr.mxu0 0.0
  %v1244 = vand.u32 %v925, 4294901760
  %v1245 = vsub.f32 %v925, %v1244
  %1246 = vmatpush1.msra.mxu0 %v1245
  %1247 = vmatprep.subr.mxu0 0.0
  %v1248 = vand.u32 %v926, 4294901760
  %v1249 = vsub.f32 %v926, %v1248
  %1250 = vmatpush1.msra.mxu0 %v1249
  %1251 = vmatprep.subr.mxu0 0.0
  %1252 = vmatpush1.msra.mxu0 0.0
  %1253 = vmatprep.subr.mxu0 0.0
  %1254 = vmatpush1.msra.mxu0 0.0
  %1255 = vmatprep.subr.mxu0 0.0
  %1256 = vmatpush1.msra.mxu0 0.0
  %1257 = vmatprep.subr.mxu0 0.0
  %1258 = vmatpush1.msra.mxu0 0.0
  %1259 = vmatprep.subr.mxu0 0.0
  %1260 = vmatpush1.msra.mxu0 0.0
  %1261 = vmatprep.subr.mxu0 0.0
  %1262 = vmatpush1.msra.mxu0 0.0
  %1263 = vmatprep.subr.mxu0 0.0
  %1264 = vmatpush1.msra.mxu0 0.0
  %1265 = vmatprep.subr.mxu0 0.0
  %1266 = vmatpush1.msra.mxu0 0.0
  %1267 = vmatprep.subr.mxu0 0.0
  %1268 = vmatpush1.msra.mxu0 0.0
  %1269 = vmatprep.subr.mxu0 0.0
  %1270 = vmatpush1.msra.mxu0 0.0
  %1271 = vmatprep.subr.mxu0 0.0
  %1272 = vmatpush1.msra.mxu0 0.0
  %1273 = vmatprep.subr.mxu0 0.0
  %1274 = vmatpush1.msra.mxu0 0.0
  %1275 = vmatprep.subr.mxu0 0.0
  %1276 = vmatpush1.msra.mxu0 0.0
  %1277 = vmatprep.subr.mxu0 0.0
  %1278 = vmatpush1.msra.mxu0 0.0
  %1279 = vmatprep.subr.mxu0 0.0
  %1280 = vmatpush1.msra.mxu0 0.0
  %1281 = vmatprep.subr.mxu0 0.0
  %1282 = vmatpush1.msra.mxu0 0.0
  %1283 = vmatprep.subr.mxu0 0.0
  %1284 = vmatpush1.msra.mxu0 0.0
  %1285 = vmatprep.subr.mxu0 0.0
  %1286 = vmatpush1.msra.mxu0 0.0
  %1287 = vmatprep.subr.mxu0 0.0
  %1288 = vmatpush1.msra.mxu0 0.0
  %1289 = vmatprep.subr.mxu0 0.0
  %1290 = vmatpush1.msra.mxu0 0.0
  %1291 = vmatprep.subr.mxu0 0.0
  %1292 = vmatpush1.msra.mxu0 0.0
  %1293 = vmatprep.subr.mxu0 0.0
  %1294 = vmatpush1.msra.mxu0 0.0
  %1295 = vmatprep.subr.mxu0 0.0
  %1296 = vmatpush1.msra.mxu0 0.0
  %1297 = vmatprep.subr.mxu0 0.0
  %1298 = vmatpush1.msra.mxu0 0.0
  %1299 = vmatprep.subr.mxu0 0.0
  %1300 = vmatpush1.msra.mxu0 0.0
  %1301 = vmatprep.subr.mxu0 0.0
  %1302 = vmatpush1.msra.mxu0 0.0
  %1303 = vmatprep.subr.mxu0 0.0
  %1304 = vmatpush1.msra.mxu0 0.0
  %1305 = vmatprep.subr.mxu0 0.0
  %1306 = vmatpush1.msra.mxu0 0.0
  %1307 = vmatprep.mubr.f32.mxu0 0.0
  %v1308 = vand.u32 %v930, 4294901760
  %v1309 = vsub.f32 %v930, %v1308
  %1310 = vmatmul.mubr.f32.gmra.mrb[0].mxu0 %v1309
  %v1311 = vpop.f32.mrb[0].mxu0
  %v1312 = vadd.f32 %v1190, %v1311
  %v1313 = vpop.f32.mrb[0].mxu0
  %1314 = vmatprep.mubr.f32.mxu0 0.0
  %v1315 = vand.u32 %v933, 4294901760
  %v1316 = vsub.f32 %v933, %v1315
  %1317 = vmatmul.mubr.f32.gmra.mrb[0].mxu0 %v1316
  %v1318 = vpop.f32.mrb[0].mxu0
  %v1319 = vadd.f32 %v1196, %v1318
  %v1320 = vpop.f32.mrb[0].mxu0
  %1321 = vmatprep.mubr.f32.mxu0 0.0
  %v1322 = vand.u32 %v936, 4294901760
  %v1323 = vsub.f32 %v936, %v1322
  %1324 = vmatmul.mubr.f32.gmra.mrb[0].mxu0 %v1323
  %v1325 = vpop.f32.mrb[0].mxu0
  %v1326 = vadd.f32 %v1202, %v1325
  %v1327 = vpop.f32.mrb[0].mxu0
  %1328 = vmatprep.mubr.f32.mxu0 0.0
  %v1329 = vand.u32 %v939, 4294901760
  %v1330 = vsub.f32 %v939, %v1329
  %1331 = vmatmul.mubr.f32.gmra.mrb[0].mxu0 %v1330
  %v1332 = vpop.f32.mrb[0].mxu0
  %v1333 = vadd.f32 %v1208, %v1332
  %v1334 = vpop.f32.mrb[0].mxu0
  %1335 = vmatprep.mubr.f32.mxu0 0.0
  %v1336 = vand.u32 %v942, 4294901760
  %v1337 = vsub.f32 %v942, %v1336
  %1338 = vmatmul.mubr.f32.gmra.mrb[0].mxu0 %v1337
  %v1339 = vpop.f32.mrb[0].mxu0
  %v1340 = vadd.f32 %v1214, %v1339
  %v1341 = vpop.f32.mrb[0].mxu0
  %1342 = vmatprep.mubr.f32.mxu0 0.0
  %v1343 = vand.u32 %v945, 4294901760
  %v1344 = vsub.f32 %v945, %v1343
  %1345 = vmatmul.mubr.f32.gmra.mrb[0].mxu0 %v1344
  %v1346 = vpop.f32.mrb[0].mxu0
  %v1347 = vadd.f32 %v1220, %v1346
  %v1348 = vpop.f32.mrb[0].mxu0
  %1349 = vmatprep.mubr.f32.mxu0 0.0
  %v1350 = vand.u32 %v948, 4294901760
  %v1351 = vsub.f32 %v948, %v1350
  %1352 = vmatmul.mubr.f32.gmra.mrb[0].mxu0 %v1351
  %v1353 = vpop.f32.mrb[0].mxu0
  %v1354 = vadd.f32 %v1226, %v1353
  %v1355 = vpop.f32.mrb[0].mxu0
  %1356 = vmatprep.mubr.f32.mxu0 0.0
  %v1357 = vand.u32 %v951, 4294901760
  %v1358 = vsub.f32 %v951, %v1357
  %1359 = vmatmul.mubr.f32.gmra.mrb[0].mxu0 %v1358
  %v1360 = vpop.f32.mrb[0].mxu0
  %v1361 = vadd.f32 %v1232, %v1360
  %v1362 = vpop.f32.mrb[0].mxu0
  %1363 = vdwg.mxu0
  %1364 = vmatprep.subr.mxu0 0.0
  %v1365 = vand.u32 %v923, 4294901760
  %1366 = vmatpush1.msra.mxu0 %v1365
  %1367 = vmatprep.subr.mxu0 0.0
  %v1368 = vand.u32 %v924, 4294901760
  %1369 = vmatpush1.msra.mxu0 %v1368
  %1370 = vmatprep.subr.mxu0 0.0
  %v1371 = vand.u32 %v925, 4294901760
  %1372 = vmatpush1.msra.mxu0 %v1371
  %1373 = vmatprep.subr.mxu0 0.0
  %v1374 = vand.u32 %v926, 4294901760
  %1375 = vmatpush1.msra.mxu0 %v1374
  %1376 = vmatprep.subr.mxu0 0.0
  %1377 = vmatpush1.msra.mxu0 0.0
  %1378 = vmatprep.subr.mxu0 0.0
  %1379 = vmatpush1.msra.mxu0 0.0
  %1380 = vmatprep.subr.mxu0 0.0
  %1381 = vmatpush1.msra.mxu0 0.0
  %1382 = vmatprep.subr.mxu0 0.0
  %1383 = vmatpush1.msra.mxu0 0.0
  %1384 = vmatprep.subr.mxu0 0.0
  %1385 = vmatpush1.msra.mxu0 0.0
  %1386 = vmatprep.subr.mxu0 0.0
  %1387 = vmatpush1.msra.mxu0 0.0
  %1388 = vmatprep.subr.mxu0 0.0
  %1389 = vmatpush1.msra.mxu0 0.0
  %1390 = vmatprep.subr.mxu0 0.0
  %1391 = vmatpush1.msra.mxu0 0.0
  %1392 = vmatprep.subr.mxu0 0.0
  %1393 = vmatpush1.msra.mxu0 0.0
  %1394 = vmatprep.subr.mxu0 0.0
  %1395 = vmatpush1.msra.mxu0 0.0
  %1396 = vmatprep.subr.mxu0 0.0
  %1397 = vmatpush1.msra.mxu0 0.0
  %1398 = vmatprep.subr.mxu0 0.0
  %1399 = vmatpush1.msra.mxu0 0.0
  %1400 = vmatprep.subr.mxu0 0.0
  %1401 = vmatpush1.msra.mxu0 0.0
  %1402 = vmatprep.subr.mxu0 0.0
  %1403 = vmatpush1.msra.mxu0 0.0
  %1404 = vmatprep.subr.mxu0 0.0
  %1405 = vmatpush1.msra.mxu0 0.0
  %1406 = vmatprep.subr.mxu0 0.0
  %1407 = vmatpush1.msra.mxu0 0.0
  %1408 = vmatprep.subr.mxu0 0.0
  %1409 = vmatpush1.msra.mxu0 0.0
  %1410 = vmatprep.subr.mxu0 0.0
  %1411 = vmatpush1.msra.mxu0 0.0
  %1412 = vmatprep.subr.mxu0 0.0
  %1413 = vmatpush1.msra.mxu0 0.0
  %1414 = vmatprep.subr.mxu0 0.0
  %1415 = vmatpush1.msra.mxu0 0.0
  %1416 = vmatprep.subr.mxu0 0.0
  %1417 = vmatpush1.msra.mxu0 0.0
  %1418 = vmatprep.subr.mxu0 0.0
  %1419 = vmatpush1.msra.mxu0 0.0
  %1420 = vmatprep.subr.mxu0 0.0
  %1421 = vmatpush1.msra.mxu0 0.0
  %1422 = vmatprep.subr.mxu0 0.0
  %1423 = vmatpush1.msra.mxu0 0.0
  %1424 = vmatprep.subr.mxu0 0.0
  %1425 = vmatpush1.msra.mxu0 0.0
  %1426 = vmatprep.subr.mxu0 0.0
  %1427 = vmatpush1.msra.mxu0 0.0
  %1428 = vmatprep.subr.mxu0 0.0
  %1429 = vmatpush1.msra.mxu0 0.0
  %1430 = vmatprep.subr.mxu0 0.0
  %1431 = vmatpush1.msra.mxu0 0.0
  %1432 = vmatprep.mubr.f32.mxu0 0.0
  %v1433 = vand.u32 %v930, 4294901760
  %v1434 = vsub.f32 %v930, %v1433
  %v1435 = vand.u32 %v1434, 4294901760
  %1436 = vmatmul.mubr.f32.gmra.mrb[0].mxu0 %v1435
  %v1437 = vpop.f32.mrb[0].mxu0
  %v1438 = vadd.f32 %v1312, %v1437
  %v1439 = vpop.f32.mrb[0].mxu0
  %1440 = vmatprep.mubr.f32.mxu0 0.0
  %v1441 = vand.u32 %v933, 4294901760
  %v1442 = vsub.f32 %v933, %v1441
  %v1443 = vand.u32 %v1442, 4294901760
  %1444 = vmatmul.mubr.f32.gmra.mrb[0].mxu0 %v1443
  %v1445 = vpop.f32.mrb[0].mxu0
  %v1446 = vadd.f32 %v1319, %v1445
  %v1447 = vpop.f32.mrb[0].mxu0
  %1448 = vmatprep.mubr.f32.mxu0 0.0
  %v1449 = vand.u32 %v936, 4294901760
  %v1450 = vsub.f32 %v936, %v1449
  %v1451 = vand.u32 %v1450, 4294901760
  %1452 = vmatmul.mubr.f32.gmra.mrb[0].mxu0 %v1451
  %v1453 = vpop.f32.mrb[0].mxu0
  %v1454 = vadd.f32 %v1326, %v1453
  %v1455 = vpop.f32.mrb[0].mxu0
  %1456 = vmatprep.mubr.f32.mxu0 0.0
  %v1457 = vand.u32 %v939, 4294901760
  %v1458 = vsub.f32 %v939, %v1457
  %v1459 = vand.u32 %v1458, 4294901760
  %1460 = vmatmul.mubr.f32.gmra.mrb[0].mxu0 %v1459
  %v1461 = vpop.f32.mrb[0].mxu0
  %v1462 = vadd.f32 %v1333, %v1461
  %v1463 = vpop.f32.mrb[0].mxu0
  %1464 = vmatprep.mubr.f32.mxu0 0.0
  %v1465 = vand.u32 %v942, 4294901760
  %v1466 = vsub.f32 %v942, %v1465
  %v1467 = vand.u32 %v1466, 4294901760
  %1468 = vmatmul.mubr.f32.gmra.mrb[0].mxu0 %v1467
  %v1469 = vpop.f32.mrb[0].mxu0
  %v1470 = vadd.f32 %v1340, %v1469
  %v1471 = vpop.f32.mrb[0].mxu0
  %1472 = vmatprep.mubr.f32.mxu0 0.0
  %v1473 = vand.u32 %v945, 4294901760
  %v1474 = vsub.f32 %v945, %v1473
  %v1475 = vand.u32 %v1474, 4294901760
  %1476 = vmatmul.mubr.f32.gmra.mrb[0].mxu0 %v1475
  %v1477 = vpop.f32.mrb[0].mxu0
  %v1478 = vadd.f32 %v1347, %v1477
  %v1479 = vpop.f32.mrb[0].mxu0
  %1480 = vmatprep.mubr.f32.mxu0 0.0
  %v1481 = vand.u32 %v948, 4294901760
  %v1482 = vsub.f32 %v948, %v1481
  %v1483 = vand.u32 %v1482, 4294901760
  %1484 = vmatmul.mubr.f32.gmra.mrb[0].mxu0 %v1483
  %v1485 = vpop.f32.mrb[0].mxu0
  %v1486 = vadd.f32 %v1354, %v1485
  %v1487 = vpop.f32.mrb[0].mxu0
  %1488 = vmatprep.mubr.f32.mxu0 0.0
  %v1489 = vand.u32 %v951, 4294901760
  %v1490 = vsub.f32 %v951, %v1489
  %v1491 = vand.u32 %v1490, 4294901760
  %1492 = vmatmul.mubr.f32.gmra.mrb[0].mxu0 %v1491
  %v1493 = vpop.f32.mrb[0].mxu0
  %v1494 = vadd.f32 %v1361, %v1493
  %v1495 = vpop.f32.mrb[0].mxu0
  %1496 = vdwg.mxu0
  %1497 = vmatprep.subr.mxu0 0.0
  %v1498 = vand.u32 %v923, 4294901760
  %v1499 = vsub.f32 %v923, %v1498
  %v1500 = vand.u32 %v1499, 4294901760
  %1501 = vmatpush1.msra.mxu0 %v1500
  %1502 = vmatprep.subr.mxu0 0.0
  %v1503 = vand.u32 %v924, 4294901760
  %v1504 = vsub.f32 %v924, %v1503
  %v1505 = vand.u32 %v1504, 4294901760
  %1506 = vmatpush1.msra.mxu0 %v1505
  %1507 = vmatprep.subr.mxu0 0.0
  %v1508 = vand.u32 %v925, 4294901760
  %v1509 = vsub.f32 %v925, %v1508
  %v1510 = vand.u32 %v1509, 4294901760
  %1511 = vmatpush1.msra.mxu0 %v1510
  %1512 = vmatprep.subr.mxu0 0.0
  %v1513 = vand.u32 %v926, 4294901760
  %v1514 = vsub.f32 %v926, %v1513
  %v1515 = vand.u32 %v1514, 4294901760
  %1516 = vmatpush1.msra.mxu0 %v1515
  %1517 = vmatprep.subr.mxu0 0.0
  %1518 = vmatpush1.msra.mxu0 0.0
  %1519 = vmatprep.subr.mxu0 0.0
  %1520 = vmatpush1.msra.mxu0 0.0
  %1521 = vmatprep.subr.mxu0 0.0
  %1522 = vmatpush1.msra.mxu0 0.0
  %1523 = vmatprep.subr.mxu0 0.0
  %1524 = vmatpush1.msra.mxu0 0.0
  %1525 = vmatprep.subr.mxu0 0.0
  %1526 = vmatpush1.msra.mxu0 0.0
  %1527 = vmatprep.subr.mxu0 0.0
  %1528 = vmatpush1.msra.mxu0 0.0
  %1529 = vmatprep.subr.mxu0 0.0
  %1530 = vmatpush1.msra.mxu0 0.0
  %1531 = vmatprep.subr.mxu0 0.0
  %1532 = vmatpush1.msra.mxu0 0.0
  %1533 = vmatprep.subr.mxu0 0.0
  %1534 = vmatpush1.msra.mxu0 0.0
  %1535 = vmatprep.subr.mxu0 0.0
  %1536 = vmatpush1.msra.mxu0 0.0
  %1537 = vmatprep.subr.mxu0 0.0
  %1538 = vmatpush1.msra.mxu0 0.0
  %1539 = vmatprep.subr.mxu0 0.0
  %1540 = vmatpush1.msra.mxu0 0.0
  %1541 = vmatprep.subr.mxu0 0.0
  %1542 = vmatpush1.msra.mxu0 0.0
  %1543 = vmatprep.subr.mxu0 0.0
  %1544 = vmatpush1.msra.mxu0 0.0
  %1545 = vmatprep.subr.mxu0 0.0
  %1546 = vmatpush1.msra.mxu0 0.0
  %1547 = vmatprep.subr.mxu0 0.0
  %1548 = vmatpush1.msra.mxu0 0.0
  %1549 = vmatprep.subr.mxu0 0.0
  %1550 = vmatpush1.msra.mxu0 0.0
  %1551 = vmatprep.subr.mxu0 0.0
  %1552 = vmatpush1.msra.mxu0 0.0
  %1553 = vmatprep.subr.mxu0 0.0
  %1554 = vmatpush1.msra.mxu0 0.0
  %1555 = vmatprep.subr.mxu0 0.0
  %1556 = vmatpush1.msra.mxu0 0.0
  %1557 = vmatprep.subr.mxu0 0.0
  %1558 = vmatpush1.msra.mxu0 0.0
  %1559 = vmatprep.subr.mxu0 0.0
  %1560 = vmatpush1.msra.mxu0 0.0
  %1561 = vmatprep.subr.mxu0 0.0
  %1562 = vmatpush1.msra.mxu0 0.0
  %1563 = vmatprep.subr.mxu0 0.0
  %1564 = vmatpush1.msra.mxu0 0.0
  %1565 = vmatprep.subr.mxu0 0.0
  %1566 = vmatpush1.msra.mxu0 0.0
  %1567 = vmatprep.subr.mxu0 0.0
  %1568 = vmatpush1.msra.mxu0 0.0
  %1569 = vmatprep.subr.mxu0 0.0
  %1570 = vmatpush1.msra.mxu0 0.0
  %1571 = vmatprep.subr.mxu0 0.0
  %1572 = vmatpush1.msra.mxu0 0.0
  %1573 = vmatprep.mubr.f32.mxu0 0.0
  %v1574 = vand.u32 %v930, 4294901760
  %1575 = vmatmul.mubr.f32.gmra.mrb[0].mxu0 %v1574
  %v1576 = vpop.f32.mrb[0].mxu0
  %v1577 = vadd.f32 %v1438, %v1576
  %v1578 = vpop.f32.mrb[0].mxu0
  %1579 = vmatprep.mubr.f32.mxu0 0.0
  %v1580 = vand.u32 %v933, 4294901760
  %1581 = vmatmul.mubr.f32.gmra.mrb[0].mxu0 %v1580
  %v1582 = vpop.f32.mrb[0].mxu0
  %v1583 = vadd.f32 %v1446, %v1582
  %v1584 = vpop.f32.mrb[0].mxu0
  %1585 = vmatprep.mubr.f32.mxu0 0.0
  %v1586 = vand.u32 %v936, 4294901760
  %1587 = vmatmul.mubr.f32.gmra.mrb[0].mxu0 %v1586
  %v1588 = vpop.f32.mrb[0].mxu0
  %v1589 = vadd.f32 %v1454, %v1588
  %v1590 = vpop.f32.mrb[0].mxu0
  %1591 = vmatprep.mubr.f32.mxu0 0.0
  %v1592 = vand.u32 %v939, 4294901760
  %1593 = vmatmul.mubr.f32.gmra.mrb[0].mxu0 %v1592
  %v1594 = vpop.f32.mrb[0].mxu0
  %v1595 = vadd.f32 %v1462, %v1594
  %v1596 = vpop.f32.mrb[0].mxu0
  %1597 = vmatprep.mubr.f32.mxu0 0.0
  %v1598 = vand.u32 %v942, 4294901760
  %1599 = vmatmul.mubr.f32.gmra.mrb[0].mxu0 %v1598
  %v1600 = vpop.f32.mrb[0].mxu0
  %v1601 = vadd.f32 %v1470, %v1600
  %v1602 = vpop.f32.mrb[0].mxu0
  %1603 = vmatprep.mubr.f32.mxu0 0.0
  %v1604 = vand.u32 %v945, 4294901760
  %1605 = vmatmul.mubr.f32.gmra.mrb[0].mxu0 %v1604
  %v1606 = vpop.f32.mrb[0].mxu0
  %v1607 = vadd.f32 %v1478, %v1606
  %v1608 = vpop.f32.mrb[0].mxu0
  %1609 = vmatprep.mubr.f32.mxu0 0.0
  %v1610 = vand.u32 %v948, 4294901760
  %1611 = vmatmul.mubr.f32.gmra.mrb[0].mxu0 %v1610
  %v1612 = vpop.f32.mrb[0].mxu0
  %v1613 = vadd.f32 %v1486, %v1612
  %v1614 = vpop.f32.mrb[0].mxu0
  %1615 = vmatprep.mubr.f32.mxu0 0.0
  %v1616 = vand.u32 %v951, 4294901760
  %1617 = vmatmul.mubr.f32.gmra.mrb[0].mxu0 %v1616
  %v1618 = vpop.f32.mrb[0].mxu0
  %v1619 = vadd.f32 %v1494, %v1618
  %v1620 = vpop.f32.mrb[0].mxu0
  %1621 = vdwg.mxu0
  %1622 = vmatprep.subr.mxu0 0.0
  %v1623 = vand.u32 %v923, 4294901760
  %1624 = vmatpush1.msra.mxu0 %v1623
  %1625 = vmatprep.subr.mxu0 0.0
  %v1626 = vand.u32 %v924, 4294901760
  %1627 = vmatpush1.msra.mxu0 %v1626
  %1628 = vmatprep.subr.mxu0 0.0
  %v1629 = vand.u32 %v925, 4294901760
  %1630 = vmatpush1.msra.mxu0 %v1629
  %1631 = vmatprep.subr.mxu0 0.0
  %v1632 = vand.u32 %v926, 4294901760
  %1633 = vmatpush1.msra.mxu0 %v1632
  %1634 = vmatprep.subr.mxu0 0.0
  %1635 = vmatpush1.msra.mxu0 0.0
  %1636 = vmatprep.subr.mxu0 0.0
  %1637 = vmatpush1.msra.mxu0 0.0
  %1638 = vmatprep.subr.mxu0 0.0
  %1639 = vmatpush1.msra.mxu0 0.0
  %1640 = vmatprep.subr.mxu0 0.0
  %1641 = vmatpush1.msra.mxu0 0.0
  %1642 = vmatprep.subr.mxu0 0.0
  %1643 = vmatpush1.msra.mxu0 0.0
  %1644 = vmatprep.subr.mxu0 0.0
  %1645 = vmatpush1.msra.mxu0 0.0
  %1646 = vmatprep.subr.mxu0 0.0
  %1647 = vmatpush1.msra.mxu0 0.0
  %1648 = vmatprep.subr.mxu0 0.0
  %1649 = vmatpush1.msra.mxu0 0.0
  %1650 = vmatprep.subr.mxu0 0.0
  %1651 = vmatpush1.msra.mxu0 0.0
  %1652 = vmatprep.subr.mxu0 0.0
  %1653 = vmatpush1.msra.mxu0 0.0
  %1654 = vmatprep.subr.mxu0 0.0
  %1655 = vmatpush1.msra.mxu0 0.0
  %1656 = vmatprep.subr.mxu0 0.0
  %1657 = vmatpush1.msra.mxu0 0.0
  %1658 = vmatprep.subr.mxu0 0.0
  %1659 = vmatpush1.msra.mxu0 0.0
  %1660 = vmatprep.subr.mxu0 0.0
  %1661 = vmatpush1.msra.mxu0 0.0
  %1662 = vmatprep.subr.mxu0 0.0
  %1663 = vmatpush1.msra.mxu0 0.0
  %1664 = vmatprep.subr.mxu0 0.0
  %1665 = vmatpush1.msra.mxu0 0.0
  %1666 = vmatprep.subr.mxu0 0.0
  %1667 = vmatpush1.msra.mxu0 0.0
  %1668 = vmatprep.subr.mxu0 0.0
  %1669 = vmatpush1.msra.mxu0 0.0
  %1670 = vmatprep.subr.mxu0 0.0
  %1671 = vmatpush1.msra.mxu0 0.0
  %1672 = vmatprep.subr.mxu0 0.0
  %1673 = vmatpush1.msra.mxu0 0.0
  %1674 = vmatprep.subr.mxu0 0.0
  %1675 = vmatpush1.msra.mxu0 0.0
  %1676 = vmatprep.subr.mxu0 0.0
  %1677 = vmatpush1.msra.mxu0 0.0
  %1678 = vmatprep.subr.mxu0 0.0
  %1679 = vmatpush1.msra.mxu0 0.0
  %1680 = vmatprep.subr.mxu0 0.0
  %1681 = vmatpush1.msra.mxu0 0.0
  %1682 = vmatprep.subr.mxu0 0.0
  %1683 = vmatpush1.msra.mxu0 0.0
  %1684 = vmatprep.subr.mxu0 0.0
  %1685 = vmatpush1.msra.mxu0 0.0
  %1686 = vmatprep.subr.mxu0 0.0
  %1687 = vmatpush1.msra.mxu0 0.0
  %1688 = vmatprep.subr.mxu0 0.0
  %1689 = vmatpush1.msra.mxu0 0.0
  %1690 = vmatprep.mubr.f32.mxu0 0.0
  %v1691 = vand.u32 %v930, 4294901760
  %1692 = vmatmul.mubr.f32.gmra.mrb[0].mxu0 %v1691
  %v1693 = vpop.f32.mrb[0].mxu0
  %v1694 = vadd.f32 %v1577, %v1693
  %v1695 = vpop.f32.mrb[0].mxu0
  %1696 = vmatprep.mubr.f32.mxu0 0.0
  %v1697 = vand.u32 %v933, 4294901760
  %1698 = vmatmul.mubr.f32.gmra.mrb[0].mxu0 %v1697
  %v1699 = vpop.f32.mrb[0].mxu0
  %v1700 = vadd.f32 %v1583, %v1699
  %v1701 = vpop.f32.mrb[0].mxu0
  %1702 = vmatprep.mubr.f32.mxu0 0.0
  %v1703 = vand.u32 %v936, 4294901760
  %1704 = vmatmul.mubr.f32.gmra.mrb[0].mxu0 %v1703
  %v1705 = vpop.f32.mrb[0].mxu0
  %v1706 = vadd.f32 %v1589, %v1705
  %v1707 = vpop.f32.mrb[0].mxu0
  %1708 = vmatprep.mubr.f32.mxu0 0.0
  %v1709 = vand.u32 %v939, 4294901760
  %1710 = vmatmul.mubr.f32.gmra.mrb[0].mxu0 %v1709
  %v1711 = vpop.f32.mrb[0].mxu0
  %v1712 = vadd.f32 %v1595, %v1711
  %v1713 = vpop.f32.mrb[0].mxu0
  %1714 = vmatprep.mubr.f32.mxu0 0.0
  %v1715 = vand.u32 %v942, 4294901760
  %1716 = vmatmul.mubr.f32.gmra.mrb[0].mxu0 %v1715
  %v1717 = vpop.f32.mrb[0].mxu0
  %v1718 = vadd.f32 %v1601, %v1717
  %v1719 = vpop.f32.mrb[0].mxu0
  %1720 = vmatprep.mubr.f32.mxu0 0.0
  %v1721 = vand.u32 %v945, 4294901760
  %1722 = vmatmul.mubr.f32.gmra.mrb[0].mxu0 %v1721
  %v1723 = vpop.f32.mrb[0].mxu0
  %v1724 = vadd.f32 %v1607, %v1723
  %v1725 = vpop.f32.mrb[0].mxu0
  %1726 = vmatprep.mubr.f32.mxu0 0.0
  %v1727 = vand.u32 %v948, 4294901760
  %1728 = vmatmul.mubr.f32.gmra.mrb[0].mxu0 %v1727
  %v1729 = vpop.f32.mrb[0].mxu0
  %v1730 = vadd.f32 %v1613, %v1729
  %v1731 = vpop.f32.mrb[0].mxu0
  %1732 = vmatprep.mubr.f32.mxu0 0.0
  %v1733 = vand.u32 %v951, 4294901760
  %1734 = vmatmul.mubr.f32.gmra.mrb[0].mxu0 %v1733
  %v1735 = vpop.f32.mrb[0].mxu0
  %v1736 = vadd.f32 %v1619, %v1735
  %v1737 = vpop.f32.mrb[0].mxu0
  %1738 = vdwg.mxu0
  %v1739 = vsel %vm823, %v1694, 0.0
  %v1740 = vsel %vm823, %v1700, 0.0
  %v1741 = vadd.f32 %v1739, %v1740
  %v1742 = vsel %vm823, %v1706, 0.0
  %v1743 = vadd.f32 %v1741, %v1742
  %v1744 = vsel %vm823, %v1712, 0.0
  %v1745 = vadd.f32 %v1743, %v1744
  %v1746 = vsel %vm823, %v1718, 0.0
  %v1747 = vadd.f32 %v1745, %v1746
  %v1748 = vsel %vm823, %v1724, 0.0
  %v1749 = vadd.f32 %v1747, %v1748
  %v1750 = vsel %vm823, %v1730, 0.0
  %v1751 = vadd.f32 %v1749, %v1750
  %v1752 = vsel %vm823, %v1736, 0.0
  %v1753 = vadd.f32 %v1751, %v1752
  %v1754 = vrot.slane %v1753, 4
  %v1755 = vadd.f32 %v1753, %v1754
  %v1756 = vrot.slane %v1755, 2
  %v1757 = vadd.f32 %v1755, %v1756
  %v1758 = vrot.slane %v1757, 1
  %v1759 = vadd.f32 %v1757, %v1758
  %v1760 = vmul.f32 %v1759, 0.015625
  %v1761 = vsub.f32 %v1694, %v1760
  %v1762 = vsub.f32 %v1700, %v1760
  %v1763 = vsub.f32 %v1706, %v1760
  %v1764 = vsub.f32 %v1712, %v1760
  %v1765 = vsub.f32 %v1718, %v1760
  %v1766 = vsub.f32 %v1724, %v1760
  %v1767 = vsub.f32 %v1730, %v1760
  %v1768 = vsub.f32 %v1736, %v1760
  %v1769 = vmul.f32 %v1761, %v1761
  %v1770 = vmul.f32 %v1762, %v1762
  %v1771 = vmul.f32 %v1763, %v1763
  %v1772 = vmul.f32 %v1764, %v1764
  %v1773 = vmul.f32 %v1765, %v1765
  %v1774 = vmul.f32 %v1766, %v1766
  %v1775 = vmul.f32 %v1767, %v1767
  %v1776 = vmul.f32 %v1768, %v1768
  %v1777 = vsel %vm823, %v1769, 0.0
  %v1778 = vsel %vm823, %v1770, 0.0
  %v1779 = vadd.f32 %v1777, %v1778
  %v1780 = vsel %vm823, %v1771, 0.0
  %v1781 = vadd.f32 %v1779, %v1780
  %v1782 = vsel %vm823, %v1772, 0.0
  %v1783 = vadd.f32 %v1781, %v1782
  %v1784 = vsel %vm823, %v1773, 0.0
  %v1785 = vadd.f32 %v1783, %v1784
  %v1786 = vsel %vm823, %v1774, 0.0
  %v1787 = vadd.f32 %v1785, %v1786
  %v1788 = vsel %vm823, %v1775, 0.0
  %v1789 = vadd.f32 %v1787, %v1788
  %v1790 = vsel %vm823, %v1776, 0.0
  %v1791 = vadd.f32 %v1789, %v1790
  %v1792 = vrot.slane %v1791, 4
  %v1793 = vadd.f32 %v1791, %v1792
  %v1794 = vrot.slane %v1793, 2
  %v1795 = vadd.f32 %v1793, %v1794
  %v1796 = vrot.slane %v1795, 1
  %v1797 = vadd.f32 %v1795, %v1796
  %v1798 = vmul.f32 %v1797, 0.015625
  %v1799 = vadd.f32 %v1798, 1e-05
  %v1800 = vrsqrt.pop %v1799
  %v1801 = vmul.f32 %v927, %v1800
  %v1803 = vlaneseq
  %v1804 = vshrl.u32 %v1803, 7
  %v1805 = vsub.s32 0, %v1804
  %v1806 = vrot.slane %v1801, %v1805
  %v1808 = vmul.f32 %v1761, %v1806
  %v1809 = vmul.f32 %v1762, %v1806
  %v1810 = vmul.f32 %v1763, %v1806
  %v1811 = vmul.f32 %v1764, %v1806
  %v1812 = vmul.f32 %v1765, %v1806
  %v1813 = vmul.f32 %v1766, %v1806
  %v1814 = vmul.f32 %v1767, %v1806
  %v1815 = vmul.f32 %v1768, %v1806
  %v1817 = vlaneseq
  %v1818 = vshrl.u32 %v1817, 7
  %v1819 = vsub.s32 0, %v1818
  %v1820 = vrot.slane %v928, %v1819
  %v1822 = vadd.f32 %v1808, %v1820
  %v1823 = vadd.f32 %v1809, %v1820
  %v1824 = vadd.f32 %v1810, %v1820
  %v1825 = vadd.f32 %v1811, %v1820
  %v1826 = vadd.f32 %v1812, %v1820
  %v1827 = vadd.f32 %v1813, %v1820
  %v1828 = vadd.f32 %v1814, %v1820
  %v1829 = vadd.f32 %v1815, %v1820
  %v1830 = vmax.f32 %v1822, 0.0
  %v1831 = vmax.f32 %v1823, 0.0
  %v1832 = vmax.f32 %v1824, 0.0
  %v1833 = vmax.f32 %v1825, 0.0
  %v1834 = vmax.f32 %v1826, 0.0
  %v1835 = vmax.f32 %v1827, 0.0
  %v1836 = vmax.f32 %v1828, 0.0
  %v1837 = vmax.f32 %v1829, 0.0
  %1838 = vst.msk [vmem:[%s7] sm:$0xff] %vm823, %v1830
  %1839 = vst.msk [vmem:[%s7 + $0x8] sm:$0xff] %vm823, %v1831
  %1840 = vst.msk [vmem:[%s7 + $0x10] sm:$0xff] %vm823, %v1832
  %1841 = vst.msk [vmem:[%s7 + $0x18] sm:$0xff] %vm823, %v1833
  %1842 = vst.msk [vmem:[%s7 + $0x20] sm:$0xff] %vm823, %v1834
  %1843 = vst.msk [vmem:[%s7 + $0x28] sm:$0xff] %vm823, %v1835
  %1844 = vst.msk [vmem:[%s7 + $0x30] sm:$0xff] %vm823, %v1836
  %1845 = vst.msk [vmem:[%s7 + $0x38] sm:$0xff] %vm823, %v1837
  // Predicated region
  $region30: #{tpu_custom_call.1} parent=0 // pred_check
    _
  $region31: #{tpu_custom_call.1} parent=0 // pred_check_branch
    %1847 = sbr.rel (0) target = $region33
  $region32: #{tpu_custom_call.1} parent=0 // pred_region
    _
  $region33: #{tpu_custom_call.1} parent=0 // pred_fallthru
    _
  // Predicated region
  $region34: #{tpu_custom_call.1} parent=0 // pred_check
    _
  $region35: #{tpu_custom_call.1} parent=0 // pred_check_branch
    %1849 = sbr.rel (0) target = $region37
  $region36: #{tpu_custom_call.1} parent=0 // pred_region
    _
  $region37: #{tpu_custom_call.1} parent=0 // pred_fallthru
    _

</llo_original>
